<compile_context>
chip_gen: v7x
topology: tpu7x:2x2x1
jax: 0.10.0
libtpu: 0.0.40
codegen_flags: <defaults>
</compile_context>

<pallas_src>
import math
from functools import partial

import numpy as np
import jax
import jax.numpy as jnp
from jax.experimental import pallas as pl
from jax.experimental.pallas import tpu as pltpu

GROUPS = 4
EPS = 1e-5


def _privconv_kernel(x_ref, w_ref, vcol_ref, o_ref, xp_s, xstack_s, *, H, W, Wp, C, Cg):
    """Fused 3x3 conv (stride 1, pad 1) + GroupNorm(4, affine=False) + ReLU for one (sample, group).

    x_ref:      (1, C, H*W)   f32   unpadded flattened input (per sample; same block for all groups)
    w_ref:      (1, Cg, 9*C)  bf16  this group's output-channel rows of the tap-stacked weights
    vcol_ref:   (Lv, 1)       f32   1.0 where lane j is a real output column (j % Wp < W)
    o_ref:      (1, 1, Cg, Lv) f32  Lv = H*Wp; columns with j % Wp >= W are garbage (sliced off by caller)
    xp_s:       (C, Lx)       bf16  VMEM scratch: zero-padded flattened input, Lx = (H+2)*Wp + 2
    xstack_s:   (9*C, Lv)     bf16  VMEM scratch: 9 shifted tap views stacked along the contraction dim
    """
    g = pl.program_id(1)
    Lv = H * Wp

    # Build the padded + tap-stacked input once per sample (groups iterate the inner grid axis).
    @pl.when(g == 0)
    def _():
        # Borders must be zero; the interior is overwritten below.
        xp_s[...] = jnp.zeros(xp_s.shape, xp_s.dtype)
        # In-VMEM zero-pad + bf16 cast: one (C, W) row copy per image row (static lane offsets).
        for h in range(H):
            base = (h + 1) * Wp + 1
            xp_s[:, base:base + W] = x_ref[0, :, h * W:(h + 1) * W].astype(jnp.bfloat16)
        # Stack the 9 shifted tap views (tap (dy,dx) == lane offset dy*Wp + dx of the padded image).
        for t in range(9):
            dy, dx = divmod(t, 3)
            off = dy * Wp + dx
            xstack_s[t * C:(t + 1) * C, :] = xp_s[:, off:off + Lv]

    # Conv for this group's output channels: single (Cg, 9C) @ (9C, Lv) bf16 matmul, fp32 accumulation.
    y = jnp.dot(w_ref[0], xstack_s[...], preferred_element_type=jnp.float32)      # (Cg, Lv) f32

    # GroupNorm stats on the MXU; vcol zeroes the Wp-W wrap-around columns inside the contraction.
    vcol = vcol_ref[...]                                                          # (Lv, 1) f32
    inv_count = 1.0 / float(H * W * Cg)                                           # compile-time constant
    s = jnp.dot(y, vcol, preferred_element_type=jnp.float32)                      # (Cg, 1) per-channel sum
    mean = jnp.sum(s, keepdims=True) * inv_count                                  # (1, 1) group mean
    d = y - mean                                                                  # reused for the output
    v = jnp.dot(d * d, vcol, preferred_element_type=jnp.float32)                  # (Cg, 1) sum of sq dev
    var = jnp.sum(v, keepdims=True) * inv_count                                   # (1, 1) group variance
    inv = jax.lax.rsqrt(var + EPS)                                                # EUP

    # Normalize + ReLU; lane-dense store (minor dim = H*Wp).
    o_ref[0, 0] = jnp.maximum(d * inv, 0.0).astype(o_ref.dtype)


def priv_conv(x, weight):
    """x: (N, C, H, W) f32; weight: (C, C, 3, 3) f32 (OIHW). Returns (N, C, H, W) f32."""
    N, C, H, W = x.shape
    assert C % GROUPS == 0
    Cg = C // GROUPS
    Wp = W + 2
    Lv = H * Wp                   # flattened output length (2 garbage columns per image row)
    Lx = (H + 2) * Wp + 2         # flattened padded input + tail so the (dy=2, dx=2) tap stays in-bounds

    # No HBM pad/cast pass: only a metadata reshape; padding + bf16 cast happen in-kernel.
    xf = x.reshape(N, C, H * W)

    # (C_out, C_in, 3, 3) -> (GROUPS, Cg, 9*C_in): w[g, o, t*C + i] = weight[g*Cg + o, i, dy, dx], t = dy*3+dx.
    w_stack = jnp.transpose(weight, (0, 2, 3, 1)).reshape(GROUPS, Cg, 9 * C).astype(jnp.bfloat16)

    # Valid-column mask as an (Lv, 1) MXU RHS (column j is real iff j % Wp < W).
    col = np.arange(Lv) % Wp
    vcol = jnp.asarray((col < W).astype(np.float32)).reshape(Lv, 1)

    kernel = partial(_privconv_kernel, H=H, W=W, Wp=Wp, C=C, Cg=Cg)

    cost = pl.CostEstimate(
        flops=2 * N * C * 9 * C * Lv + 2 * N * 2 * C * Lv,
        transcendentals=N * GROUPS,
        bytes_accessed=N * C * H * W * 4 + 9 * C * C * 2 + Lv * 4 + N * C * Lv * 4,
    )

    out = pl.pallas_call(
        kernel,
        out_shape=jax.ShapeDtypeStruct((N, GROUPS, Cg, Lv), jnp.float32),
        grid_spec=pltpu.PrefetchScalarGridSpec(
            num_scalar_prefetch=0,
            grid=(N, GROUPS),                                    # groups inner -> x block not re-DMA'd
            in_specs=[
                pl.BlockSpec((1, C, H * W), lambda n, g: (n, 0, 0)),     # per-sample fp32 input
                pl.BlockSpec((1, Cg, 9 * C), lambda n, g: (g, 0, 0)),    # this group's tap-stacked weights
                pl.BlockSpec((Lv, 1), lambda n, g: (0, 0)),              # shared valid-column mask
            ],
            out_specs=pl.BlockSpec((1, 1, Cg, Lv), lambda n, g: (n, g, 0, 0)),
            scratch_shapes=[
                pltpu.VMEM((C, Lx), jnp.bfloat16),               # zero-padded bf16 input (persists over groups)
                pltpu.VMEM((9 * C, Lv), jnp.bfloat16),           # tap-stacked matmul RHS
            ],
        ),
        compiler_params=pltpu.CompilerParams(
            dimension_semantics=("parallel", "arbitrary"),       # groups must stay sequential (shared scratch)
            vmem_limit_bytes=56 * 1024 * 1024,                   # safe under v7x's 64 MiB; raise on v5e/v6e
        ),
        cost_estimate=cost,
    )(xf, w_stack, vcol)

    # (N, GROUPS, Cg, Lv) -> NCHW directly: drop the 2 wrap-around columns per row (no transpose).
    # TODO(synk): emit bf16 output if the consumer accepts it (halves the largest HBM write).
    return out.reshape(N, C, H, Wp)[:, :, :, :W]


def _reference(x, weight):
    y = jax.lax.conv_general_dilated(
        x, weight, window_strides=(1, 1), padding=((1, 1), (1, 1)),
        dimension_numbers=("NCHW", "OIHW", "NCHW"),
        precision=jax.lax.Precision.HIGHEST)
    N, C, H, W = y.shape
    yg = y.reshape(N, GROUPS, C // GROUPS, H, W)
    mean = yg.mean(axis=(2, 3, 4), keepdims=True)
    var = yg.var(axis=(2, 3, 4), keepdims=True)
    yn = (yg - mean) / jnp.sqrt(var + EPS)
    return jnp.maximum(yn.reshape(N, C, H, W), 0.0)


if __name__ == "__main__":
    key = jax.random.PRNGKey(0)
    kx, kw = jax.random.split(key)

    N, C, H, W = 2, 8, 16, 16                     # C_in = C_out = 8, 4 groups of 2 channels
    x = jax.random.normal(kx, (N, C, H, W), dtype=jnp.float32)
    # Deterministic Conv2d weight init (kaiming-uniform-like scale), shape (C_out, C_in, 3, 3).
    fan_in = C * 3 * 3
    bound = 1.0 / math.sqrt(fan_in)
    weight = jax.random.uniform(kw, (C, C, 3, 3), dtype=jnp.float32,
                                minval=-bound, maxval=bound)

    out = jax.block_until_ready(priv_conv(x, weight))

    # Reference on the same bf16-rounded operands (the kernel feeds the MXU bf16 and
    # accumulates in fp32), so the 1e-3 tolerance stays tight.
    xb = x.astype(jnp.bfloat16).astype(jnp.float32)
    wb = weight.astype(jnp.bfloat16).astype(jnp.float32)
    ref = _reference(xb, wb)
    np.testing.assert_allclose(np.asarray(out), np.asarray(ref), rtol=1e-3, atol=1e-3)

    print("KERNEL_OK")
</pallas_src>

<mosaic_0001>
module attributes {stable_mosaic.version = 11 : i64} {
  func.func @_privconv_kernel(%arg0: i32, %arg1: i32, %arg2: memref<1x8x256xf32, #tpu.memory_space<vmem>>, %arg3: memref<1x2x72xbf16, #tpu.memory_space<vmem>>, %arg4: memref<288x1xf32, #tpu.memory_space<vmem>>, %arg5: memref<1x1x2x288xf32, #tpu.memory_space<vmem>>, %arg6: memref<8x326xbf16, #tpu.memory_space<vmem>>, %arg7: memref<72x288xbf16, #tpu.memory_space<vmem>>) attributes {dimension_semantics = [#tpu.dimension_semantics<parallel>, #tpu.dimension_semantics<arbitrary>], iteration_bounds = array<i64: 2, 4>, scalar_prefetch = 0 : i64, scratch_operands = 2 : i64, tpu.core_type = #tpu.core_type<tc>, window_params = [{transform_indices = @transform_0, window_bounds = array<i64: 1, 8, 256>}, {transform_indices = @transform_1, window_bounds = array<i64: 1, 2, 72>}, {pipeline_mode = #tpu.pipeline_mode<synchronous>, transform_indices = @transform_2, window_bounds = array<i64: 288, 1>}, {transform_indices = @transform_3, window_bounds = array<i64: 1, 1, 2, 288>}]} {
    %c0_i32 = arith.constant 0 : i32
    %0 = arith.cmpi eq, %arg1, %c0_i32 : i32
    %1 = arith.extui %0 : i1 to i32
    %c0_i32_0 = arith.constant 0 : i32
    %2 = arith.cmpi ne, %1, %c0_i32_0 : i32
    scf.if %2 {
      %cst_19 = arith.constant 0.000000e+00 : bf16
      %37 = vector.broadcast %cst_19 : bf16 to vector<8x326xbf16>
      %c0_20 = arith.constant 0 : index
      %c0_21 = arith.constant 0 : index
      %38 = vector.load %arg6[%c0_20, %c0_21] : memref<8x326xbf16, #tpu.memory_space<vmem>>, vector<8x326xbf16>
      tpu.vector_store %arg6[%c0_20, %c0_21], %37 {strides = array<i32>} : memref<8x326xbf16, #tpu.memory_space<vmem>>, vector<8x326xbf16>,
      %c0_22 = arith.constant 0 : index
      %c0_23 = arith.constant 0 : index
      %c0_24 = arith.constant 0 : index
      %39 = vector.load %arg2[%c0_22, %c0_23, %c0_24] : memref<1x8x256xf32, #tpu.memory_space<vmem>>, vector<1x8x16xf32>
      %40 = vector.shape_cast %39 : vector<1x8x16xf32> to vector<8x16xf32>
      %41 = arith.truncf %40 : vector<8x16xf32> to vector<8x16xbf16>
      %c0_25 = arith.constant 0 : index
      %c19 = arith.constant 19 : index
      %42 = vector.load %arg6[%c0_25, %c19] : memref<8x326xbf16, #tpu.memory_space<vmem>>, vector<8x16xbf16>
      tpu.vector_store %arg6[%c0_25, %c19], %41 {strides = array<i32>} : memref<8x326xbf16, #tpu.memory_space<vmem>>, vector<8x16xbf16>,
      %c0_26 = arith.constant 0 : index
      %c0_27 = arith.constant 0 : index
      %c16 = arith.constant 16 : index
      %43 = vector.load %arg2[%c0_26, %c0_27, %c16] : memref<1x8x256xf32, #tpu.memory_space<vmem>>, vector<1x8x16xf32>
      %44 = vector.shape_cast %43 : vector<1x8x16xf32> to vector<8x16xf32>
      %45 = arith.truncf %44 : vector<8x16xf32> to vector<8x16xbf16>
      %c0_28 = arith.constant 0 : index
      %c37 = arith.constant 37 : index
      %46 = vector.load %arg6[%c0_28, %c37] : memref<8x326xbf16, #tpu.memory_space<vmem>>, vector<8x16xbf16>
      tpu.vector_store %arg6[%c0_28, %c37], %45 {strides = array<i32>} : memref<8x326xbf16, #tpu.memory_space<vmem>>, vector<8x16xbf16>,
      %c0_29 = arith.constant 0 : index
      %c0_30 = arith.constant 0 : index
      %c32 = arith.constant 32 : index
      %47 = vector.load %arg2[%c0_29, %c0_30, %c32] : memref<1x8x256xf32, #tpu.memory_space<vmem>>, vector<1x8x16xf32>
      %48 = vector.shape_cast %47 : vector<1x8x16xf32> to vector<8x16xf32>
      %49 = arith.truncf %48 : vector<8x16xf32> to vector<8x16xbf16>
      %c0_31 = arith.constant 0 : index
      %c55 = arith.constant 55 : index
      %50 = vector.load %arg6[%c0_31, %c55] : memref<8x326xbf16, #tpu.memory_space<vmem>>, vector<8x16xbf16>
      tpu.vector_store %arg6[%c0_31, %c55], %49 {strides = array<i32>} : memref<8x326xbf16, #tpu.memory_space<vmem>>, vector<8x16xbf16>,
      %c0_32 = arith.constant 0 : index
      %c0_33 = arith.constant 0 : index
      %c48 = arith.constant 48 : index
      %51 = vector.load %arg2[%c0_32, %c0_33, %c48] : memref<1x8x256xf32, #tpu.memory_space<vmem>>, vector<1x8x16xf32>
      %52 = vector.shape_cast %51 : vector<1x8x16xf32> to vector<8x16xf32>
      %53 = arith.truncf %52 : vector<8x16xf32> to vector<8x16xbf16>
      %c0_34 = arith.constant 0 : index
      %c73 = arith.constant 73 : index
      %54 = vector.load %arg6[%c0_34, %c73] : memref<8x326xbf16, #tpu.memory_space<vmem>>, vector<8x16xbf16>
      tpu.vector_store %arg6[%c0_34, %c73], %53 {strides = array<i32>} : memref<8x326xbf16, #tpu.memory_space<vmem>>, vector<8x16xbf16>,
      %c0_35 = arith.constant 0 : index
      %c0_36 = arith.constant 0 : index
      %c64 = arith.constant 64 : index
      %55 = vector.load %arg2[%c0_35, %c0_36, %c64] : memref<1x8x256xf32, #tpu.memory_space<vmem>>, vector<1x8x16xf32>
      %56 = vector.shape_cast %55 : vector<1x8x16xf32> to vector<8x16xf32>
      %57 = arith.truncf %56 : vector<8x16xf32> to vector<8x16xbf16>
      %c0_37 = arith.constant 0 : index
      %c91 = arith.constant 91 : index
      %58 = vector.load %arg6[%c0_37, %c91] : memref<8x326xbf16, #tpu.memory_space<vmem>>, vector<8x16xbf16>
      tpu.vector_store %arg6[%c0_37, %c91], %57 {strides = array<i32>} : memref<8x326xbf16, #tpu.memory_space<vmem>>, vector<8x16xbf16>,
      %c0_38 = arith.constant 0 : index
      %c0_39 = arith.constant 0 : index
      %c80 = arith.constant 80 : index
      %59 = vector.load %arg2[%c0_38, %c0_39, %c80] : memref<1x8x256xf32, #tpu.memory_space<vmem>>, vector<1x8x16xf32>
      %60 = vector.shape_cast %59 : vector<1x8x16xf32> to vector<8x16xf32>
      %61 = arith.truncf %60 : vector<8x16xf32> to vector<8x16xbf16>
      %c0_40 = arith.constant 0 : index
      %c109 = arith.constant 109 : index
      %62 = vector.load %arg6[%c0_40, %c109] : memref<8x326xbf16, #tpu.memory_space<vmem>>, vector<8x16xbf16>
      tpu.vector_store %arg6[%c0_40, %c109], %61 {strides = array<i32>} : memref<8x326xbf16, #tpu.memory_space<vmem>>, vector<8x16xbf16>,
      %c0_41 = arith.constant 0 : index
      %c0_42 = arith.constant 0 : index
      %c96 = arith.constant 96 : index
      %63 = vector.load %arg2[%c0_41, %c0_42, %c96] : memref<1x8x256xf32, #tpu.memory_space<vmem>>, vector<1x8x16xf32>
      %64 = vector.shape_cast %63 : vector<1x8x16xf32> to vector<8x16xf32>
      %65 = arith.truncf %64 : vector<8x16xf32> to vector<8x16xbf16>
      %c0_43 = arith.constant 0 : index
      %c127 = arith.constant 127 : index
      %66 = vector.load %arg6[%c0_43, %c127] : memref<8x326xbf16, #tpu.memory_space<vmem>>, vector<8x16xbf16>
      tpu.vector_store %arg6[%c0_43, %c127], %65 {strides = array<i32>} : memref<8x326xbf16, #tpu.memory_space<vmem>>, vector<8x16xbf16>,
      %c0_44 = arith.constant 0 : index
      %c0_45 = arith.constant 0 : index
      %c112 = arith.constant 112 : index
      %67 = vector.load %arg2[%c0_44, %c0_45, %c112] : memref<1x8x256xf32, #tpu.memory_space<vmem>>, vector<1x8x16xf32>
      %68 = vector.shape_cast %67 : vector<1x8x16xf32> to vector<8x16xf32>
      %69 = arith.truncf %68 : vector<8x16xf32> to vector<8x16xbf16>
      %c0_46 = arith.constant 0 : index
      %c145 = arith.constant 145 : index
      %70 = vector.load %arg6[%c0_46, %c145] : memref<8x326xbf16, #tpu.memory_space<vmem>>, vector<8x16xbf16>
      tpu.vector_store %arg6[%c0_46, %c145], %69 {strides = array<i32>} : memref<8x326xbf16, #tpu.memory_space<vmem>>, vector<8x16xbf16>,
      %c0_47 = arith.constant 0 : index
      %c0_48 = arith.constant 0 : index
      %c128 = arith.constant 128 : index
      %71 = vector.load %arg2[%c0_47, %c0_48, %c128] : memref<1x8x256xf32, #tpu.memory_space<vmem>>, vector<1x8x16xf32>
      %72 = vector.shape_cast %71 : vector<1x8x16xf32> to vector<8x16xf32>
      %73 = arith.truncf %72 : vector<8x16xf32> to vector<8x16xbf16>
      %c0_49 = arith.constant 0 : index
      %c163 = arith.constant 163 : index
      %74 = vector.load %arg6[%c0_49, %c163] : memref<8x326xbf16, #tpu.memory_space<vmem>>, vector<8x16xbf16>
      tpu.vector_store %arg6[%c0_49, %c163], %73 {strides = array<i32>} : memref<8x326xbf16, #tpu.memory_space<vmem>>, vector<8x16xbf16>,
      %c0_50 = arith.constant 0 : index
      %c0_51 = arith.constant 0 : index
      %c144 = arith.constant 144 : index
      %75 = vector.load %arg2[%c0_50, %c0_51, %c144] : memref<1x8x256xf32, #tpu.memory_space<vmem>>, vector<1x8x16xf32>
      %76 = vector.shape_cast %75 : vector<1x8x16xf32> to vector<8x16xf32>
      %77 = arith.truncf %76 : vector<8x16xf32> to vector<8x16xbf16>
      %c0_52 = arith.constant 0 : index
      %c181 = arith.constant 181 : index
      %78 = vector.load %arg6[%c0_52, %c181] : memref<8x326xbf16, #tpu.memory_space<vmem>>, vector<8x16xbf16>
      tpu.vector_store %arg6[%c0_52, %c181], %77 {strides = array<i32>} : memref<8x326xbf16, #tpu.memory_space<vmem>>, vector<8x16xbf16>,
      %c0_53 = arith.constant 0 : index
      %c0_54 = arith.constant 0 : index
      %c160 = arith.constant 160 : index
      %79 = vector.load %arg2[%c0_53, %c0_54, %c160] : memref<1x8x256xf32, #tpu.memory_space<vmem>>, vector<1x8x16xf32>
      %80 = vector.shape_cast %79 : vector<1x8x16xf32> to vector<8x16xf32>
      %81 = arith.truncf %80 : vector<8x16xf32> to vector<8x16xbf16>
      %c0_55 = arith.constant 0 : index
      %c199 = arith.constant 199 : index
      %82 = vector.load %arg6[%c0_55, %c199] : memref<8x326xbf16, #tpu.memory_space<vmem>>, vector<8x16xbf16>
      tpu.vector_store %arg6[%c0_55, %c199], %81 {strides = array<i32>} : memref<8x326xbf16, #tpu.memory_space<vmem>>, vector<8x16xbf16>,
      %c0_56 = arith.constant 0 : index
      %c0_57 = arith.constant 0 : index
      %c176 = arith.constant 176 : index
      %83 = vector.load %arg2[%c0_56, %c0_57, %c176] : memref<1x8x256xf32, #tpu.memory_space<vmem>>, vector<1x8x16xf32>
      %84 = vector.shape_cast %83 : vector<1x8x16xf32> to vector<8x16xf32>
      %85 = arith.truncf %84 : vector<8x16xf32> to vector<8x16xbf16>
      %c0_58 = arith.constant 0 : index
      %c217 = arith.constant 217 : index
      %86 = vector.load %arg6[%c0_58, %c217] : memref<8x326xbf16, #tpu.memory_space<vmem>>, vector<8x16xbf16>
      tpu.vector_store %arg6[%c0_58, %c217], %85 {strides = array<i32>} : memref<8x326xbf16, #tpu.memory_space<vmem>>, vector<8x16xbf16>,
      %c0_59 = arith.constant 0 : index
      %c0_60 = arith.constant 0 : index
      %c192 = arith.constant 192 : index
      %87 = vector.load %arg2[%c0_59, %c0_60, %c192] : memref<1x8x256xf32, #tpu.memory_space<vmem>>, vector<1x8x16xf32>
      %88 = vector.shape_cast %87 : vector<1x8x16xf32> to vector<8x16xf32>
      %89 = arith.truncf %88 : vector<8x16xf32> to vector<8x16xbf16>
      %c0_61 = arith.constant 0 : index
      %c235 = arith.constant 235 : index
      %90 = vector.load %arg6[%c0_61, %c235] : memref<8x326xbf16, #tpu.memory_space<vmem>>, vector<8x16xbf16>
      tpu.vector_store %arg6[%c0_61, %c235], %89 {strides = array<i32>} : memref<8x326xbf16, #tpu.memory_space<vmem>>, vector<8x16xbf16>,
      %c0_62 = arith.constant 0 : index
      %c0_63 = arith.constant 0 : index
      %c208 = arith.constant 208 : index
      %91 = vector.load %arg2[%c0_62, %c0_63, %c208] : memref<1x8x256xf32, #tpu.memory_space<vmem>>, vector<1x8x16xf32>
      %92 = vector.shape_cast %91 : vector<1x8x16xf32> to vector<8x16xf32>
      %93 = arith.truncf %92 : vector<8x16xf32> to vector<8x16xbf16>
      %c0_64 = arith.constant 0 : index
      %c253 = arith.constant 253 : index
      %94 = vector.load %arg6[%c0_64, %c253] : memref<8x326xbf16, #tpu.memory_space<vmem>>, vector<8x16xbf16>
      tpu.vector_store %arg6[%c0_64, %c253], %93 {strides = array<i32>} : memref<8x326xbf16, #tpu.memory_space<vmem>>, vector<8x16xbf16>,
      %c0_65 = arith.constant 0 : index
      %c0_66 = arith.constant 0 : index
      %c224 = arith.constant 224 : index
      %95 = vector.load %arg2[%c0_65, %c0_66, %c224] : memref<1x8x256xf32, #tpu.memory_space<vmem>>, vector<1x8x16xf32>
      %96 = vector.shape_cast %95 : vector<1x8x16xf32> to vector<8x16xf32>
      %97 = arith.truncf %96 : vector<8x16xf32> to vector<8x16xbf16>
      %c0_67 = arith.constant 0 : index
      %c271 = arith.constant 271 : index
      %98 = vector.load %arg6[%c0_67, %c271] : memref<8x326xbf16, #tpu.memory_space<vmem>>, vector<8x16xbf16>
      tpu.vector_store %arg6[%c0_67, %c271], %97 {strides = array<i32>} : memref<8x326xbf16, #tpu.memory_space<vmem>>, vector<8x16xbf16>,
      %c0_68 = arith.constant 0 : index
      %c0_69 = arith.constant 0 : index
      %c240 = arith.constant 240 : index
      %99 = vector.load %arg2[%c0_68, %c0_69, %c240] : memref<1x8x256xf32, #tpu.memory_space<vmem>>, vector<1x8x16xf32>
      %100 = vector.shape_cast %99 : vector<1x8x16xf32> to vector<8x16xf32>
      %101 = arith.truncf %100 : vector<8x16xf32> to vector<8x16xbf16>
      %c0_70 = arith.constant 0 : index
      %c289 = arith.constant 289 : index
      %102 = vector.load %arg6[%c0_70, %c289] : memref<8x326xbf16, #tpu.memory_space<vmem>>, vector<8x16xbf16>
      tpu.vector_store %arg6[%c0_70, %c289], %101 {strides = array<i32>} : memref<8x326xbf16, #tpu.memory_space<vmem>>, vector<8x16xbf16>,
      %c0_71 = arith.constant 0 : index
      %c0_72 = arith.constant 0 : index
      %103 = vector.load %arg6[%c0_71, %c0_72] : memref<8x326xbf16, #tpu.memory_space<vmem>>, vector<8x288xbf16>
      %c0_73 = arith.constant 0 : index
      %c0_74 = arith.constant 0 : index
      %104 = vector.load %arg7[%c0_73, %c0_74] : memref<72x288xbf16, #tpu.memory_space<vmem>>, vector<8x288xbf16>
      tpu.vector_store %arg7[%c0_73, %c0_74], %103 {strides = array<i32>} : memref<72x288xbf16, #tpu.memory_space<vmem>>, vector<8x288xbf16>,
      %c0_75 = arith.constant 0 : index
      %c1 = arith.constant 1 : index
      %105 = vector.load %arg6[%c0_75, %c1] : memref<8x326xbf16, #tpu.memory_space<vmem>>, vector<8x288xbf16>
      %c8 = arith.constant 8 : index
      %c0_76 = arith.constant 0 : index
      %106 = vector.load %arg7[%c8, %c0_76] : memref<72x288xbf16, #tpu.memory_space<vmem>>, vector<8x288xbf16>
      tpu.vector_store %arg7[%c8, %c0_76], %105 {strides = array<i32>} : memref<72x288xbf16, #tpu.memory_space<vmem>>, vector<8x288xbf16>,
      %c0_77 = arith.constant 0 : index
      %c2 = arith.constant 2 : index
      %107 = vector.load %arg6[%c0_77, %c2] : memref<8x326xbf16, #tpu.memory_space<vmem>>, vector<8x288xbf16>
      %c16_78 = arith.constant 16 : index
      %c0_79 = arith.constant 0 : index
      %108 = vector.load %arg7[%c16_78, %c0_79] : memref<72x288xbf16, #tpu.memory_space<vmem>>, vector<8x288xbf16>
      tpu.vector_store %arg7[%c16_78, %c0_79], %107 {strides = array<i32>} : memref<72x288xbf16, #tpu.memory_space<vmem>>, vector<8x288xbf16>,
      %c0_80 = arith.constant 0 : index
      %c18 = arith.constant 18 : index
      %109 = vector.load %arg6[%c0_80, %c18] : memref<8x326xbf16, #tpu.memory_space<vmem>>, vector<8x288xbf16>
      %c24 = arith.constant 24 : index
      %c0_81 = arith.constant 0 : index
      %110 = vector.load %arg7[%c24, %c0_81] : memref<72x288xbf16, #tpu.memory_space<vmem>>, vector<8x288xbf16>
      tpu.vector_store %arg7[%c24, %c0_81], %109 {strides = array<i32>} : memref<72x288xbf16, #tpu.memory_space<vmem>>, vector<8x288xbf16>,
      %c0_82 = arith.constant 0 : index
      %c19_83 = arith.constant 19 : index
      %111 = vector.load %arg6[%c0_82, %c19_83] : memref<8x326xbf16, #tpu.memory_space<vmem>>, vector<8x288xbf16>
      %c32_84 = arith.constant 32 : index
      %c0_85 = arith.constant 0 : index
      %112 = vector.load %arg7[%c32_84, %c0_85] : memref<72x288xbf16, #tpu.memory_space<vmem>>, vector<8x288xbf16>
      tpu.vector_store %arg7[%c32_84, %c0_85], %111 {strides = array<i32>} : memref<72x288xbf16, #tpu.memory_space<vmem>>, vector<8x288xbf16>,
      %c0_86 = arith.constant 0 : index
      %c20 = arith.constant 20 : index
      %113 = vector.load %arg6[%c0_86, %c20] : memref<8x326xbf16, #tpu.memory_space<vmem>>, vector<8x288xbf16>
      %c40 = arith.constant 40 : index
      %c0_87 = arith.constant 0 : index
      %114 = vector.load %arg7[%c40, %c0_87] : memref<72x288xbf16, #tpu.memory_space<vmem>>, vector<8x288xbf16>
      tpu.vector_store %arg7[%c40, %c0_87], %113 {strides = array<i32>} : memref<72x288xbf16, #tpu.memory_space<vmem>>, vector<8x288xbf16>,
      %c0_88 = arith.constant 0 : index
      %c36 = arith.constant 36 : index
      %115 = vector.load %arg6[%c0_88, %c36] : memref<8x326xbf16, #tpu.memory_space<vmem>>, vector<8x288xbf16>
      %c48_89 = arith.constant 48 : index
      %c0_90 = arith.constant 0 : index
      %116 = vector.load %arg7[%c48_89, %c0_90] : memref<72x288xbf16, #tpu.memory_space<vmem>>, vector<8x288xbf16>
      tpu.vector_store %arg7[%c48_89, %c0_90], %115 {strides = array<i32>} : memref<72x288xbf16, #tpu.memory_space<vmem>>, vector<8x288xbf16>,
      %c0_91 = arith.constant 0 : index
      %c37_92 = arith.constant 37 : index
      %117 = vector.load %arg6[%c0_91, %c37_92] : memref<8x326xbf16, #tpu.memory_space<vmem>>, vector<8x288xbf16>
      %c56 = arith.constant 56 : index
      %c0_93 = arith.constant 0 : index
      %118 = vector.load %arg7[%c56, %c0_93] : memref<72x288xbf16, #tpu.memory_space<vmem>>, vector<8x288xbf16>
      tpu.vector_store %arg7[%c56, %c0_93], %117 {strides = array<i32>} : memref<72x288xbf16, #tpu.memory_space<vmem>>, vector<8x288xbf16>,
      %c0_94 = arith.constant 0 : index
      %c38 = arith.constant 38 : index
      %119 = vector.load %arg6[%c0_94, %c38] : memref<8x326xbf16, #tpu.memory_space<vmem>>, vector<8x288xbf16>
      %c64_95 = arith.constant 64 : index
      %c0_96 = arith.constant 0 : index
      %120 = vector.load %arg7[%c64_95, %c0_96] : memref<72x288xbf16, #tpu.memory_space<vmem>>, vector<8x288xbf16>
      tpu.vector_store %arg7[%c64_95, %c0_96], %119 {strides = array<i32>} : memref<72x288xbf16, #tpu.memory_space<vmem>>, vector<8x288xbf16>,
    } else {
    }
    %c0 = arith.constant 0 : index
    %c0_1 = arith.constant 0 : index
    %c0_2 = arith.constant 0 : index
    %3 = vector.load %arg3[%c0, %c0_1, %c0_2] : memref<1x2x72xbf16, #tpu.memory_space<vmem>>, vector<1x2x72xbf16>
    %4 = vector.shape_cast %3 : vector<1x2x72xbf16> to vector<2x72xbf16>
    %c0_3 = arith.constant 0 : index
    %c0_4 = arith.constant 0 : index
    %5 = vector.load %arg7[%c0_3, %c0_4] : memref<72x288xbf16, #tpu.memory_space<vmem>>, vector<72x288xbf16>
    %cst = arith.constant dense<0.000000e+00> : vector<2x288xf32>
    %6 = tpu.matmul %4, %5, %cst {dimension_numbers = #tpu.dot_dimension_numbers<[1], [0], [0], [1], [0, 0, 1, 1], [], []>} : vector<2x72xbf16>, vector<72x288xbf16>, vector<2x288xf32> -> vector<2x288xf32>
    %c0_5 = arith.constant 0 : index
    %c0_6 = arith.constant 0 : index
    %7 = vector.load %arg4[%c0_5, %c0_6] : memref<288x1xf32, #tpu.memory_space<vmem>>, vector<288x1xf32>
    %cst_7 = arith.constant dense<0.000000e+00> : vector<2x1xf32>
    %8 = tpu.matmul %6, %7, %cst_7 {dimension_numbers = #tpu.dot_dimension_numbers<[1], [0], [0], [1], [0, 0, 1, 1], [], []>} : vector<2x288xf32>, vector<288x1xf32>, vector<2x1xf32> -> vector<2x1xf32>
    %9 = vector.shape_cast %8 : vector<2x1xf32> to vector<1x2x1xf32>
    %cst_8 = arith.constant dense<0.000000e+00> : vector<1xf32>
    %10 = vector.multi_reduction <add>, %9, %cst_8 [1, 2] : vector<1x2x1xf32> to vector<1xf32>
    %11 = vector.shape_cast %10 : vector<1xf32> to vector<1x1x1xf32>
    %12 = vector.extract %11[0, 0, 0] : f32 from vector<1x1x1xf32>
    %13 = vector.broadcast %12 : f32 to vector<1x1xf32>
    %cst_9 = arith.constant 0.001953125 : f32
    %14 = vector.broadcast %cst_9 : f32 to vector<1x1xf32>
    %15 = arith.mulf %13, %14 : vector<1x1xf32>
    %16 = vector.broadcast %15 : vector<1x1xf32> to vector<2x288xf32>
    %17 = arith.subf %6, %16 : vector<2x288xf32>
    %18 = arith.mulf %17, %17 : vector<2x288xf32>
    %cst_10 = arith.constant dense<0.000000e+00> : vector<2x1xf32>
    %19 = tpu.matmul %18, %7, %cst_10 {dimension_numbers = #tpu.dot_dimension_numbers<[1], [0], [0], [1], [0, 0, 1, 1], [], []>} : vector<2x288xf32>, vector<288x1xf32>, vector<2x1xf32> -> vector<2x1xf32>
    %20 = vector.shape_cast %19 : vector<2x1xf32> to vector<1x2x1xf32>
    %cst_11 = arith.constant dense<0.000000e+00> : vector<1xf32>
    %21 = vector.multi_reduction <add>, %20, %cst_11 [1, 2] : vector<1x2x1xf32> to vector<1xf32>
    %22 = vector.shape_cast %21 : vector<1xf32> to vector<1x1x1xf32>
    %23 = vector.extract %22[0, 0, 0] : f32 from vector<1x1x1xf32>
    %24 = vector.broadcast %23 : f32 to vector<1x1xf32>
    %cst_12 = arith.constant 0.001953125 : f32
    %25 = vector.broadcast %cst_12 : f32 to vector<1x1xf32>
    %26 = arith.mulf %24, %25 : vector<1x1xf32>
    %cst_13 = arith.constant 9.99999974E-6 : f32
    %27 = vector.broadcast %cst_13 : f32 to vector<1x1xf32>
    %28 = arith.addf %26, %27 : vector<1x1xf32>
    %29 = math.rsqrt %28 : vector<1x1xf32>
    %30 = vector.broadcast %29 : vector<1x1xf32> to vector<2x288xf32>
    %31 = arith.mulf %17, %30 : vector<2x288xf32>
    %cst_14 = arith.constant 0.000000e+00 : f32
    %32 = vector.broadcast %cst_14 : f32 to vector<2x288xf32>
    %33 = arith.maximumf %31, %32 : vector<2x288xf32>
    %c0_15 = arith.constant 0 : index
    %c0_16 = arith.constant 0 : index
    %c0_17 = arith.constant 0 : index
    %c0_18 = arith.constant 0 : index
    %34 = vector.load %arg5[%c0_15, %c0_16, %c0_17, %c0_18] : memref<1x1x2x288xf32, #tpu.memory_space<vmem>>, vector<1x1x2x288xf32>
    %35 = vector.shape_cast %34 : vector<1x1x2x288xf32> to vector<2x288xf32>
    %36 = vector.shape_cast %33 : vector<2x288xf32> to vector<1x1x2x288xf32>
    tpu.vector_store %arg5[%c0_15, %c0_16, %c0_17, %c0_18], %36 {strides = array<i32>} : memref<1x1x2x288xf32, #tpu.memory_space<vmem>>, vector<1x1x2x288xf32>,
    return
  }
  func.func @transform_0(%arg0: i32, %arg1: i32) -> (i32, i32, i32) {
    %c0_i32 = arith.constant 0 : i32
    %c0_i32_0 = arith.constant 0 : i32
    %c0_i32_1 = arith.constant 0 : i32
    return %arg0, %c0_i32, %c0_i32_0 : i32, i32, i32
  }
  func.func @transform_1(%arg0: i32, %arg1: i32) -> (i32, i32, i32) {
    %c0_i32 = arith.constant 0 : i32
    %c0_i32_0 = arith.constant 0 : i32
    %c0_i32_1 = arith.constant 0 : i32
    return %arg1, %c0_i32, %c0_i32_0 : i32, i32, i32
  }
  func.func @transform_2(%arg0: i32, %arg1: i32) -> (i32, i32) {
    %c0_i32 = arith.constant 0 : i32
    %c0_i32_0 = arith.constant 0 : i32
    %c0_i32_1 = arith.constant 0 : i32
    return %c0_i32, %c0_i32_0 : i32, i32
  }
  func.func @transform_3(%arg0: i32, %arg1: i32) -> (i32, i32, i32, i32) {
    %c0_i32 = arith.constant 0 : i32
    %c0_i32_0 = arith.constant 0 : i32
    %c0_i32_1 = arith.constant 0 : i32
    return %arg0, %arg1, %c0_i32, %c0_i32_0 : i32, i32, i32, i32
  }
}

</mosaic_0001>

<llo_original>
// kernel: tpu_custom_call.1
$region0: #{tpu_custom_call.1}
  #allocation0 [shape = 'u32[]', space=smem, size = 0x4, offset = 0x4, fixed_abs, tag = 'smem constant byte address 0x4 - core index']
  #allocation1 [shape = 'u32[144,128]{1,0:T(1,128)}', space=vmem, size = 0x12000, scoped, tag = 'internal scratch']
  #allocation2 [shape = 'bf16[8,326]{1,0:T(8,128)(2,1)}', space=vmem, size = 0x1800, scoped, tag = 'scratch operand']
  #allocation3 [shape = 'bf16[72,288]{1,0:T(8,128)(2,1)}', space=vmem, size = 0xd800, scoped, tag = 'scratch operand']
  %s0 = inlined_call_operand.vmem [shape: f32[2,8,256], index: 0, kind: input, shape index: {}]
  %s1 = inlined_call_operand.vmem [shape: bf16[4,2,72], index: 1, kind: input, shape index: {}]
  %s2 = inlined_call_operand.vmem [shape: f32[288,1], index: 2, kind: input, shape index: {}]
  %s3 = inlined_call_operand.hbm [shape: f32[2,4,2,288], index: 3, kind: output, shape index: {}]
  %s4 = sld [smem:[#allocation0]]
  $region49: #{tpu_custom_call.1} parent=0
    _
  %s6 = ssub.s32 1, %s4
  %s7 = scalar_select 0, %s6, %s4
  $region1: #{tpu_custom_call.1} parent=0
    #allocation4 [shape = 'u8[6144]{0}', space=vmem, size = 0x1800, scoped, tag = 'output window, operand 0']
    #allocation5 [shape = 's32[2]{0}', space=sflag, size = 0x8, scoped, tag = 'scoped memory for tpu_custom_call.1']
    %8 = vsyncpa [#allocation5], 0
    %s9 = scalar_lea.sflag [#allocation5], 1
    %10 = vsyncpa %s9, 0
    loop: start=0, step=1, limit=10
    $region2: #{tpu_custom_call.1} parent=1 // loop_pre_header
      _
    $region3: #{tpu_custom_call.1} parent=1 // loop_header
      %s12 = sphi 0, %s16
      %p13 = scmp.ge.s32.totalorder %s12, 10
      %s19 = sphi 0, %s31
      %s20 = sphi 0, %s27
      %s21 = sphi 0, %s19
      %s22 = sphi 0, %s20
      %s23 = sphi 0, %s21
      %s24 = sphi 0, %s22
      %s34 = sphi 0, %s36
      %s37 = sphi 0, %s34
      %s38 = sphi 0, %s37
      %s54 = sphi 0, %s38
      %s60 = sphi 0, %s62
      %s63 = sphi 0, %s60
      %s64 = sphi 0, %s63
      %s80 = sphi 0, %s64
      %s84 = sphi 0, %s84
      %s86 = sphi 0, %s84
      %s87 = sphi 0, %s86
      %s101 = sphi 0, %s87
      %s109 = sphi 0, %s111
      %s112 = sphi 0, %s109
      %s113 = sphi 0, %s112
      %s129 = sphi 0, %s113
    $region4: #{tpu_custom_call.1} parent=1 // loop_header_branch
      %15 = sbr.rel (%p13) target = $region8
    $region5: #{tpu_custom_call.1} parent=1 // loop_body
      %s17 = ssub.s32 %s12, 1
      %s18 = ssub.s32 %s12, 2
      %s25 = sadd.s32 1, %s20
      %p26 = scmp.ge.s32.totalorder %s25, 4
      %s27 = scalar_select %p26, 0, %s25
      %s28 = sadd.s32 1, %s19
      %s29 = scalar_select %p26, %s28, %s19
      %p30 = scmp.ge.s32.totalorder %s29, 2
      %s31 = scalar_select %p30, 0, %s29
      %s32 = ssub.s32 %s19, %s31
      %p33 = scmp.eq.s32.totalorder %s32, 0
      %s35 = sadd.s32 %s34, 1
      %s36 = scalar_select %p33, %s34, %s35
      %p39 = pneg %p33
      %p40 = scmp.eq.s32.totalorder %s12, 7
      %p41 = por %p39, %p40
      %p42 = scmp.ne.s32.totalorder %s34, %s37
      %p43 = scmp.eq.s32.totalorder %s12, 0
      %p44 = por %p42, %p43
      %p45 = scmp.ne.s32.totalorder %s34, %s37
      %p46 = scmp.eq.s32.totalorder %s17, 7
      %p47 = por %p45, %p46
      %p48 = scmp.ne.s32.totalorder %s37, %s38
      %p49 = scmp.eq.s32.totalorder %s17, 0
      %p50 = por %p48, %p49
      %p51 = scmp.ne.s32.totalorder %s37, %s38
      %p52 = scmp.eq.s32.totalorder %s18, 7
      %p53 = por %p51, %p52
      %p55 = scmp.ne.s32.totalorder %s38, %s54
      %p56 = scmp.eq.s32.totalorder %s18, 0
      %p57 = por %p55, %p56
      %s58 = ssub.s32 %s20, %s27
      %p59 = scmp.eq.s32.totalorder %s58, 0
      %s61 = sadd.s32 %s60, 1
      %s62 = scalar_select %p59, %s60, %s61
      %p65 = pneg %p59
      %p66 = scmp.eq.s32.totalorder %s12, 7
      %p67 = por %p65, %p66
      %p68 = scmp.ne.s32.totalorder %s60, %s63
      %p69 = scmp.eq.s32.totalorder %s12, 0
      %p70 = por %p68, %p69
      %p71 = scmp.ne.s32.totalorder %s60, %s63
      %p72 = scmp.eq.s32.totalorder %s17, 7
      %p73 = por %p71, %p72
      %p74 = scmp.ne.s32.totalorder %s63, %s64
      %p75 = scmp.eq.s32.totalorder %s17, 0
      %p76 = por %p74, %p75
      %p77 = scmp.ne.s32.totalorder %s63, %s64
      %p78 = scmp.eq.s32.totalorder %s18, 7
      %p79 = por %p77, %p78
      %p81 = scmp.ne.s32.totalorder %s64, %s80
      %p82 = scmp.eq.s32.totalorder %s18, 0
      %p83 = por %p81, %p82
      %s85 = sadd.s32 %s84, 1
      %p88 = scmp.eq.s32.totalorder %s12, 7
      %p89 = scmp.ne.s32.totalorder %s84, %s86
      %p90 = scmp.eq.s32.totalorder %s12, 0
      %p91 = por %p89, %p90
      %p92 = scmp.ne.s32.totalorder %s84, %s86
      %p93 = scmp.eq.s32.totalorder %s17, 7
      %p94 = por %p92, %p93
      %p95 = scmp.ne.s32.totalorder %s86, %s87
      %p96 = scmp.eq.s32.totalorder %s17, 0
      %p97 = por %p95, %p96
      %p98 = scmp.ne.s32.totalorder %s86, %s87
      %p99 = scmp.eq.s32.totalorder %s18, 7
      %p100 = por %p98, %p99
      %p102 = scmp.ne.s32.totalorder %s87, %s101
      %p103 = scmp.eq.s32.totalorder %s18, 0
      %p104 = por %p102, %p103
      %s105 = ssub.s32 %s19, %s31
      %s106 = ssub.s32 %s20, %s27
      %s107 = sor.u32 %s105, %s106
      %p108 = scmp.eq.s32.totalorder %s107, 0
      %s110 = sadd.s32 %s109, 1
      %s111 = scalar_select %p108, %s109, %s110
      %p114 = pneg %p108
      %p115 = scmp.eq.s32.totalorder %s12, 7
      %p116 = por %p114, %p115
      %p117 = scmp.ne.s32.totalorder %s109, %s112
      %p118 = scmp.eq.s32.totalorder %s12, 0
      %p119 = por %p117, %p118
      %p120 = scmp.ne.s32.totalorder %s109, %s112
      %p121 = scmp.eq.s32.totalorder %s17, 7
      %p122 = por %p120, %p121
      %p123 = scmp.ne.s32.totalorder %s112, %s113
      %p124 = scmp.eq.s32.totalorder %s17, 0
      %p125 = por %p123, %p124
      %p126 = scmp.ne.s32.totalorder %s112, %s113
      %p127 = scmp.eq.s32.totalorder %s18, 7
      %p128 = por %p126, %p127
      %p130 = scmp.ne.s32.totalorder %s113, %s129
      %p131 = scmp.eq.s32.totalorder %s18, 0
      %p132 = por %p130, %p131
      %p133 = scmp.le.s32.totalorder 1, %s12
      %p134 = scmp.lt.s32.totalorder %s12, 9
      %p135 = pnand %p133, %p134
      %p136 = pneg %p135
      // Predicated region
      $region9: #{tpu_custom_call.1} parent=5 // pred_check
        _
      $region10: #{tpu_custom_call.1} parent=5 // pred_check_branch
        %138 = sbr.rel (%p135) target = $region12
      $region11: #{tpu_custom_call.1} parent=5 // pred_region
        %s139 = ssub.s32 %s12, 1
        // Predicated region
        $region13: #{tpu_custom_call.1} parent=11 // pred_check
          %p140 = pneg %p97
        $region14: #{tpu_custom_call.1} parent=11 // pred_check_branch
          %142 = sbr.rel (%p140) target = $region16
        $region15: #{tpu_custom_call.1} parent=11 // pred_region
          _
        $region16: #{tpu_custom_call.1} parent=11 // pred_fallthru
          _
      $region12: #{tpu_custom_call.1} parent=5 // pred_fallthru
        _
      %p143 = scmp.lt.s32.totalorder %s12, 8
      // Predicated region
      $region17: #{tpu_custom_call.1} parent=5 // pred_check
        %p144 = pneg %p143
      $region18: #{tpu_custom_call.1} parent=5 // pred_check_branch
        %146 = sbr.rel (%p144) target = $region20
      $region19: #{tpu_custom_call.1} parent=5 // pred_region
        // Predicated region
        $region21: #{tpu_custom_call.1} parent=19 // pred_check
          %p147 = pneg %p44
        $region22: #{tpu_custom_call.1} parent=19 // pred_check_branch
          %149 = sbr.rel (%p147) target = $region24
        $region23: #{tpu_custom_call.1} parent=19 // pred_region
          %p150 = scmp.lt.s32.totalorder %s19, 1
          %s151 = scalar_select %p150, %s19, 1
          %s152 = smul.addr %s151, 2
          %s153 = smul.addr %s152, 8
          %s154 = scalar_lea.vmem %s0, %s153
        $region24: #{tpu_custom_call.1} parent=19 // pred_fallthru
          _
        // Predicated region
        $region25: #{tpu_custom_call.1} parent=19 // pred_check
          %p155 = pneg %p70
        $region26: #{tpu_custom_call.1} parent=19 // pred_check_branch
          %157 = sbr.rel (%p155) target = $region28
        $region27: #{tpu_custom_call.1} parent=19 // pred_region
          %p158 = scmp.lt.s32.totalorder %s20, 3
          %s159 = scalar_select %p158, %s20, 3
          %s160 = scalar_lea.vmem %s1, %s159
        $region28: #{tpu_custom_call.1} parent=19 // pred_fallthru
          _
      $region20: #{tpu_custom_call.1} parent=5 // pred_fallthru
        _
      %p161 = scmp.le.s32.totalorder 1, %s12
      %p162 = scmp.lt.s32.totalorder %s12, 9
      %p163 = pnand %p161, %p162
      %p164 = pneg %p163
      // Predicated region
      $region29: #{tpu_custom_call.1} parent=5 // pred_check
        _
      $region30: #{tpu_custom_call.1} parent=5 // pred_check_branch
        %166 = sbr.rel (%p163) target = $region32
      $region31: #{tpu_custom_call.1} parent=5 // pred_region
        %s167 = ssub.s32 %s12, 1
        %p168 = scmp.lt.s32.totalorder %s21, 1
        %s169 = scalar_select %p168, %s21, 1
        %s170 = smul.addr %s169, 2
        %s171 = smul.addr %s170, 8
        %s172 = scalar_lea.vmem %s0, %s171
        %p173 = pneg %p50
        %p174 = pneg %p47
        %p175 = scmp.lt.s32.totalorder %s22, 3
        %s176 = scalar_select %p175, %s22, 3
        %s177 = scalar_lea.vmem %s1, %s176
        %p178 = pneg %p76
        %p179 = pneg %p73
        %p180 = pneg %p97
        %p181 = pneg %p94
        %p182 = pneg %p125
        %p183 = pneg %p122
        %s184 = sand.u32 %s112, 1
        %s185 = scalar_lea.sflag [#allocation5], %s184
        %s186 = sand.u32 %s112, 1
        %s187 = smul.addr %s186, 6
        %s188 = scalar_lea.vmem [#allocation4], %s187
        %p189 = scmp.lt.s32.totalorder %s21, 1
        %s190 = scalar_select %p189, %s21, 1
        %s191 = smul.addr %s190, 2
        %s192 = smul.addr %s191, 8
        %s193 = scalar_lea.vmem %s0, %s192
        %p194 = scmp.lt.s32.totalorder %s22, 3
        %s195 = scalar_select %p194, %s22, 3
        %s196 = scalar_lea.vmem %s1, %s195
        %p198 = scmp.eq.s32.totalorder %s22, 0
        // Predicated region
        $region33: #{tpu_custom_call.1} parent=31 // pred_check
          %p199 = pneg %p198
        $region34: #{tpu_custom_call.1} parent=31 // pred_check_branch
          %201 = sbr.rel (%p199) target = $region36
        $region35: #{tpu_custom_call.1} parent=31 // pred_region
          %202 = vst [vmem:[#allocation2] sm:$0xff] 0
          %vm203 = vcmask 568320
          %204 = vst.msk [vmem:[#allocation2 + $0x8] sm:$0xf] %vm203, 0
          %v205 = vld [vmem:[%s193] sm:$0xff]
          %v206 = vpack.c.bf16 %v205, %v205
          %v208 = vunpack.c.l.b16 %v206
          %v209 = vpack.c.b16 %v208, %v208
          %210 = vrot.lane.b32.xlu0 %v209, 19
          %v211 = vpop.permute.xlu0 %210
          %vm213 = vcmask 281752
          %214 = vst.msk [vmem:[#allocation2] sm:$0xf] %vm213, %v211
          %v215 = vld [vmem:[%s193] sm:$0xff]
          %v216 = vpack.c.bf16 %v215, %v215
          %v218 = vunpack.c.l.b16 %v216
          %v219 = vpack.c.b16 %v218, %v218
          %220 = vrot.lane.b32.xlu0 %v219, 21
          %v221 = vpop.permute.xlu0 %220
          %vm223 = vcmask 429352
          %224 = vst.msk [vmem:[#allocation2] sm:$0xf] %vm223, %v221
          %v225 = vld [vmem:[%s193] sm:$0xff]
          %v226 = vpack.c.bf16 %v225, %v225
          %v228 = vunpack.c.l.b16 %v226
          %v229 = vpack.c.b16 %v228, %v228
          %230 = vrot.lane.b32.xlu0 %v229, 23
          %v231 = vpop.permute.xlu0 %230
          %vm233 = vcmask 576952
          %234 = vst.msk [vmem:[#allocation2] sm:$0xf] %vm233, %v231
          %v235 = vld [vmem:[%s193] sm:$0xff]
          %v236 = vpack.c.bf16 %v235, %v235
          %v238 = vunpack.c.l.b16 %v236
          %v239 = vpack.c.b16 %v238, %v238
          %240 = vrot.lane.b32.xlu0 %v239, 25
          %v241 = vpop.permute.xlu0 %240
          %vm243 = vcmask 724552
          %244 = vst.msk [vmem:[#allocation2] sm:$0xf] %vm243, %v241
          %v245 = vld [vmem:[%s193] sm:$0xff]
          %v246 = vpack.c.bf16 %v245, %v245
          %v248 = vunpack.c.l.b16 %v246
          %v249 = vpack.c.b16 %v248, %v248
          %250 = vrot.lane.b32.xlu0 %v249, 27
          %v251 = vpop.permute.xlu0 %250
          %vm253 = vcmask 872152
          %254 = vst.msk [vmem:[#allocation2] sm:$0xf] %vm253, %v251
          %v255 = vld [vmem:[%s193] sm:$0xff]
          %v256 = vpack.c.bf16 %v255, %v255
          %v258 = vunpack.c.l.b16 %v256
          %v259 = vpack.c.b16 %v258, %v258
          %260 = vrot.lane.b32.xlu0 %v259, 29
          %v261 = vpop.permute.xlu0 %260
          %vm263 = vcmask 1019752
          %264 = vst.msk [vmem:[#allocation2] sm:$0xf] %vm263, %v261
          %v265 = vld [vmem:[%s193] sm:$0xff]
          %v266 = vpack.c.bf16 %v265, %v265
          %v268 = vunpack.c.l.b16 %v266
          %v269 = vpack.c.b16 %v268, %v268
          %270 = vrot.lane.b32.xlu0 %v269, 31
          %v271 = vpop.permute.xlu0 %270
          %v272 = vrot.slane %v271, 4
          %vm273 = vcmask 252928
          %v274 = vsel %vm273, %v272, %v271
          %vm276 = vcmask 1044472
          %vm277 = vcmask 121860
          %vm278 = vmor %vm277, %vm276
          %279 = vst.msk [vmem:[#allocation2] sm:$0xff] %vm278, %v274
          %v280 = vld [vmem:[%s193] sm:$0xff]
          %v281 = vpack.c.bf16 %v280, %v280
          %v283 = vunpack.c.l.b16 %v281
          %v284 = vpack.c.b16 %v283, %v283
          %285 = vrot.lane.b32.xlu0 %v284, 33
          %v286 = vpop.permute.xlu0 %285
          %vm288 = vcmask 265352
          %289 = vst.msk [vmem:[#allocation2 + $0x4] sm:$0xf] %vm288, %v286
          %v290 = vld [vmem:[%s193 + $0x8] sm:$0xff]
          %v291 = vpack.c.bf16 %v290, %v290
          %v293 = vunpack.c.l.b16 %v291
          %v294 = vpack.c.b16 %v293, %v293
          %295 = vrot.lane.b32.xlu0 %v294, 35
          %v296 = vpop.permute.xlu0 %295
          %vm298 = vcmask 412952
          %299 = vst.msk [vmem:[#allocation2 + $0x4] sm:$0xf] %vm298, %v296
          %v300 = vld [vmem:[%s193 + $0x8] sm:$0xff]
          %v301 = vpack.c.bf16 %v300, %v300
          %v303 = vunpack.c.l.b16 %v301
          %v304 = vpack.c.b16 %v303, %v303
          %305 = vrot.lane.b32.xlu0 %v304, 37
          %v306 = vpop.permute.xlu0 %305
          %vm308 = vcmask 560552
          %309 = vst.msk [vmem:[#allocation2 + $0x4] sm:$0xf] %vm308, %v306
          %v310 = vld [vmem:[%s193 + $0x8] sm:$0xff]
          %v311 = vpack.c.bf16 %v310, %v310
          %v313 = vunpack.c.l.b16 %v311
          %v314 = vpack.c.b16 %v313, %v313
          %315 = vrot.lane.b32.xlu0 %v314, 39
          %v316 = vpop.permute.xlu0 %315
          %vm318 = vcmask 708152
          %319 = vst.msk [vmem:[#allocation2 + $0x4] sm:$0xf] %vm318, %v316
          %v320 = vld [vmem:[%s193 + $0x8] sm:$0xff]
          %v321 = vpack.c.bf16 %v320, %v320
          %v323 = vunpack.c.l.b16 %v321
          %v324 = vpack.c.b16 %v323, %v323
          %325 = vrot.lane.b32.xlu0 %v324, 41
          %v326 = vpop.permute.xlu0 %325
          %vm328 = vcmask 855752
          %329 = vst.msk [vmem:[#allocation2 + $0x4] sm:$0xf] %vm328, %v326
          %v330 = vld [vmem:[%s193 + $0x8] sm:$0xff]
          %v331 = vpack.c.bf16 %v330, %v330
          %v333 = vunpack.c.l.b16 %v331
          %v334 = vpack.c.b16 %v333, %v333
          %335 = vrot.lane.b32.xlu0 %v334, 43
          %v336 = vpop.permute.xlu0 %335
          %vm338 = vcmask 1003352
          %339 = vst.msk [vmem:[#allocation2 + $0x4] sm:$0xf] %vm338, %v336
          %v340 = vld [vmem:[%s193 + $0x8] sm:$0xff]
          %v341 = vpack.c.bf16 %v340, %v340
          %v343 = vunpack.c.l.b16 %v341
          %v344 = vpack.c.b16 %v343, %v343
          %345 = vrot.lane.b32.xlu0 %v344, 45
          %v346 = vpop.permute.xlu0 %345
          %v347 = vrot.slane %v346, 4
          %vm348 = vcmask 367616
          %v349 = vsel %vm348, %v347, %v346
          %vm351 = vcmask 1044456
          %vm352 = vcmask 105476
          %vm353 = vmor %vm352, %vm351
          %354 = vst.msk [vmem:[#allocation2 + $0x4] sm:$0xff] %vm353, %v349
          %v355 = vld [vmem:[%s193 + $0x8] sm:$0xff]
          %v356 = vpack.c.bf16 %v355, %v355
          %v358 = vunpack.c.l.b16 %v356
          %v359 = vpack.c.b16 %v358, %v358
          %360 = vrot.lane.b32.xlu0 %v359, 47
          %v361 = vpop.permute.xlu0 %360
          %vm363 = vcmask 248952
          %364 = vst.msk [vmem:[#allocation2 + $0x8] sm:$0xf] %vm363, %v361
          %v365 = vld [vmem:[%s193 + $0x8] sm:$0xff]
          %v366 = vpack.c.bf16 %v365, %v365
          %v368 = vunpack.c.l.b16 %v366
          %v369 = vpack.c.b16 %v368, %v368
          %370 = vrot.lane.b32.xlu0 %v369, 49
          %v371 = vpop.permute.xlu0 %370
          %vm373 = vcmask 396552
          %374 = vst.msk [vmem:[#allocation2 + $0x8] sm:$0xf] %vm373, %v371
          %v375 = vld [vmem:[#allocation2] sm:$0xff]
          %v376 = vld [vmem:[#allocation2 + $0x8] sm:$0xf]
          %377 = vst [vmem:[#allocation3] sm:$0xff] %v375
          %vm378 = vcmask 257024
          %379 = vst.msk [vmem:[#allocation3 + $0x8] sm:$0xf] %vm378, %v376
          %v380 = vld [vmem:[#allocation2] sm:$0xff]
          %v381 = vld [vmem:[#allocation2 + $0x8] sm:$0xf]
          %384 = vrot.lane.b32.xlu0 %v380, 127
          %v385 = vpop.permute.xlu0 %384
          %386 = vrot.lane.b32.xlu0 %v381, 127
          %v387 = vpop.permute.xlu0 %386
          %v388 = vrot.slane %v385, 4
          %v389 = vrot.slane %v387, 4
          %vm390 = vcmask 1043456
          %v391 = vsel %vm390, %v388, %v389
          %vm392 = vcmask 1039360
          %v393 = vsel %vm392, %v385, %v391
          %396 = vst [vmem:[#allocation3 + $0xc] sm:$0xff] %v393
          %397 = vst.msk [vmem:[#allocation3 + $0x14] sm:$0xf] %vm378, %v387
          %v398 = vld [vmem:[#allocation2] sm:$0xff]
          %v399 = vld [vmem:[#allocation2 + $0x8] sm:$0xf]
          %402 = vrot.lane.b32.xlu0 %v398, 126
          %v403 = vpop.permute.xlu0 %402
          %404 = vrot.lane.b32.xlu0 %v399, 126
          %v405 = vpop.permute.xlu0 %404
          %v406 = vrot.slane %v403, 4
          %v407 = vrot.slane %v405, 4
          %v408 = vsel %vm390, %v406, %v407
          %vm409 = vcmask 1031168
          %v410 = vsel %vm409, %v403, %v408
          %413 = vst [vmem:[#allocation3 + $0x18] sm:$0xff] %v410
          %414 = vst.msk [vmem:[#allocation3 + $0x20] sm:$0xf] %vm378, %v405
          %v415 = vld [vmem:[#allocation2] sm:$0xff]
          %v416 = vld [vmem:[#allocation2 + $0x8] sm:$0xf]
          %419 = vrot.lane.b32.xlu0 %v415, 110
          %v420 = vpop.permute.xlu0 %419
          %421 = vrot.lane.b32.xlu0 %v416, 110
          %v422 = vpop.permute.xlu0 %421
          %v423 = vrot.slane %v420, 4
          %v424 = vrot.slane %v422, 4
          %v425 = vsel %vm390, %v423, %v424
          %vm426 = vcmask 900096
          %v427 = vsel %vm426, %v420, %v425
          %430 = vst [vmem:[#allocation3 + $0x24] sm:$0xff] %v427
          %431 = vst.msk [vmem:[#allocation3 + $0x2c] sm:$0xf] %vm378, %v422
          %v432 = vld [vmem:[#allocation2] sm:$0xff]
          %v433 = vld [vmem:[#allocation2 + $0x8] sm:$0xf]
          %436 = vrot.lane.b32.xlu0 %v432, 109
          %v437 = vpop.permute.xlu0 %436
          %438 = vrot.lane.b32.xlu0 %v433, 109
          %v439 = vpop.permute.xlu0 %438
          %v440 = vrot.slane %v437, 4
          %v441 = vrot.slane %v439, 4
          %v442 = vsel %vm390, %v440, %v441
          %vm443 = vcmask 891904
          %v444 = vsel %vm443, %v437, %v442
          %447 = vst [vmem:[#allocation3 + $0x30] sm:$0xff] %v444
          %448 = vst.msk [vmem:[#allocation3 + $0x38] sm:$0xf] %vm378, %v439
          %v449 = vld [vmem:[#allocation2] sm:$0xff]
          %v450 = vld [vmem:[#allocation2 + $0x8] sm:$0xf]
          %453 = vrot.lane.b32.xlu0 %v449, 108
          %v454 = vpop.permute.xlu0 %453
          %455 = vrot.lane.b32.xlu0 %v450, 108
          %v456 = vpop.permute.xlu0 %455
          %v457 = vrot.slane %v454, 4
          %v458 = vrot.slane %v456, 4
          %v459 = vsel %vm390, %v457, %v458
          %vm460 = vcmask 883712
          %v461 = vsel %vm460, %v454, %v459
          %464 = vst [vmem:[#allocation3 + $0x3c] sm:$0xff] %v461
          %465 = vst.msk [vmem:[#allocation3 + $0x44] sm:$0xf] %vm378, %v456
          %v466 = vld [vmem:[#allocation2] sm:$0xff]
          %v467 = vld [vmem:[#allocation2 + $0x8] sm:$0xf]
          %470 = vrot.lane.b32.xlu0 %v466, 92
          %v471 = vpop.permute.xlu0 %470
          %472 = vrot.lane.b32.xlu0 %v467, 92
          %v473 = vpop.permute.xlu0 %472
          %v474 = vrot.slane %v471, 4
          %v475 = vrot.slane %v473, 4
          %v476 = vsel %vm390, %v474, %v475
          %vm477 = vcmask 752640
          %v478 = vsel %vm477, %v471, %v476
          %481 = vst [vmem:[#allocation3 + $0x48] sm:$0xff] %v478
          %482 = vst.msk [vmem:[#allocation3 + $0x50] sm:$0xf] %vm378, %v473
          %v483 = vld [vmem:[#allocation2] sm:$0xff]
          %v484 = vld [vmem:[#allocation2 + $0x8] sm:$0xf]
          %487 = vrot.lane.b32.xlu0 %v483, 91
          %v488 = vpop.permute.xlu0 %487
          %489 = vrot.lane.b32.xlu0 %v484, 91
          %v490 = vpop.permute.xlu0 %489
          %v491 = vrot.slane %v488, 4
          %v492 = vrot.slane %v490, 4
          %v493 = vsel %vm390, %v491, %v492
          %vm494 = vcmask 744448
          %v495 = vsel %vm494, %v488, %v493
          %498 = vst [vmem:[#allocation3 + $0x54] sm:$0xff] %v495
          %499 = vst.msk [vmem:[#allocation3 + $0x5c] sm:$0xf] %vm378, %v490
          %v500 = vld [vmem:[#allocation2] sm:$0xff]
          %v501 = vld [vmem:[#allocation2 + $0x8] sm:$0xf]
          %504 = vrot.lane.b32.xlu0 %v500, 90
          %v505 = vpop.permute.xlu0 %504
          %506 = vrot.lane.b32.xlu0 %v501, 90
          %v507 = vpop.permute.xlu0 %506
          %v508 = vrot.slane %v505, 4
          %v509 = vrot.slane %v507, 4
          %v510 = vsel %vm390, %v508, %v509
          %vm511 = vcmask 736256
          %v512 = vsel %vm511, %v505, %v510
          %515 = vst [vmem:[#allocation3 + $0x60] sm:$0xff] %v512
          %516 = vst.msk [vmem:[#allocation3 + $0x68] sm:$0xf] %vm378, %v507
        $region36: #{tpu_custom_call.1} parent=31 // pred_fallthru
          _
        %v517 = vld [vmem:[%s196] sm:$0x1]
        %v518 = vld [vmem:[#allocation3] sm:$0xff]
        %v519 = vld [vmem:[#allocation3 + $0x8] sm:$0xf]
        %v520 = vld [vmem:[#allocation3 + $0xc] sm:$0xff]
        %v521 = vld [vmem:[#allocation3 + $0x14] sm:$0xf]
        %v522 = vld [vmem:[#allocation3 + $0x18] sm:$0xff]
        %v523 = vld [vmem:[#allocation3 + $0x20] sm:$0xf]
        %v524 = vld [vmem:[#allocation3 + $0x24] sm:$0xff]
        %v525 = vld [vmem:[#allocation3 + $0x2c] sm:$0xf]
        %v526 = vld [vmem:[#allocation3 + $0x30] sm:$0xff]
        %v527 = vld [vmem:[#allocation3 + $0x38] sm:$0xf]
        %v528 = vld [vmem:[#allocation3 + $0x3c] sm:$0xff]
        %v529 = vld [vmem:[#allocation3 + $0x44] sm:$0xf]
        %v530 = vld [vmem:[#allocation3 + $0x48] sm:$0xff]
        %v531 = vld [vmem:[#allocation3 + $0x50] sm:$0xf]
        %v532 = vld [vmem:[#allocation3 + $0x54] sm:$0xff]
        %v533 = vld [vmem:[#allocation3 + $0x5c] sm:$0xf]
        %v534 = vld [vmem:[#allocation3 + $0x60] sm:$0xff]
        %v535 = vld [vmem:[#allocation3 + $0x68] sm:$0xf]
        %v554 = vunpack.c.l.b16 %v518
        %v555 = vunpack.c.h.b16 %v518
        %v556 = vunpack.c.l.b16 %v519
        %v557 = vunpack.c.l.b16 %v520
        %v558 = vunpack.c.h.b16 %v520
        %v559 = vunpack.c.l.b16 %v521
        %v560 = vunpack.c.l.b16 %v522
        %v561 = vunpack.c.h.b16 %v522
        %v562 = vunpack.c.l.b16 %v523
        %v563 = vunpack.c.l.b16 %v524
        %v564 = vunpack.c.h.b16 %v524
        %v565 = vunpack.c.l.b16 %v525
        %v566 = vunpack.c.l.b16 %v526
        %v567 = vunpack.c.h.b16 %v526
        %v568 = vunpack.c.l.b16 %v527
        %v569 = vunpack.c.l.b16 %v528
        %v570 = vunpack.c.h.b16 %v528
        %v571 = vunpack.c.l.b16 %v529
        %v572 = vunpack.c.l.b16 %v530
        %v573 = vunpack.c.h.b16 %v530
        %v574 = vunpack.c.l.b16 %v531
        %v575 = vunpack.c.l.b16 %v532
        %v576 = vunpack.c.h.b16 %v532
        %v577 = vunpack.c.l.b16 %v533
        %v578 = vunpack.c.l.b16 %v534
        %v579 = vunpack.c.h.b16 %v534
        %v580 = vunpack.c.l.b16 %v535
        %v581 = vpack.c.b16 %v557, %v554
        %v582 = vpack.c.b16 %v558, %v555
        %v583 = vpack.c.b16 %v559, %v556
        %v584 = vpack.c.b16 %v563, %v560
        %v585 = vpack.c.b16 %v564, %v561
        %v586 = vpack.c.b16 %v565, %v562
        %v587 = vpack.c.b16 %v569, %v566
        %v588 = vpack.c.b16 %v570, %v567
        %v589 = vpack.c.b16 %v571, %v568
        %v590 = vpack.c.b16 %v575, %v572
        %v591 = vpack.c.b16 %v576, %v573
        %v592 = vpack.c.b16 %v577, %v574
        %v593 = vpack.c.b16 %v578, %v578
        %v594 = vpack.c.b16 %v579, %v579
        %v595 = vpack.c.b16 %v580, %v580
        %vm608 = vcmask 588800
        %v610 = vsel %vm608, %v517, 0
        %vm612 = vcmask 1043456
        %v614 = vsel %vm612, %v593, 0
        %v617 = vsel %vm612, %v594, 0
        %v620 = vsel %vm612, %v595, 0
        %622 = vmatprep.subr.bf16.mxu0 %v582
        %623 = vmatpush1.bf16.msra.mxu0 %v581
        %624 = vmatprep.subr.bf16.mxu0 %v585
        %625 = vmatpush1.bf16.msra.mxu0 %v584
        %626 = vmatprep.subr.bf16.mxu0 %v588
        %627 = vmatpush1.bf16.msra.mxu0 %v587
        %628 = vmatprep.subr.bf16.mxu0 %v591
        %629 = vmatpush1.bf16.msra.mxu0 %v590
        %630 = vmatprep.subr.bf16.mxu0 %v617
        %631 = vmatpush1.bf16.msra.mxu0 %v614
        %632 = vmatprep.subr.bf16.mxu0 0
        %633 = vmatpush1.bf16.msra.mxu0 0
        %634 = vmatprep.subr.bf16.mxu0 0
        %635 = vmatpush1.bf16.msra.mxu0 0
        %636 = vmatprep.subr.bf16.mxu0 0
        %637 = vmatpush1.bf16.msra.mxu0 0
        %638 = vmatprep.subr.bf16.mxu0 0
        %639 = vmatpush1.bf16.msra.mxu0 0
        %640 = vmatprep.subr.bf16.mxu0 0
        %641 = vmatpush1.bf16.msra.mxu0 0
        %642 = vmatprep.subr.bf16.mxu0 0
        %643 = vmatpush1.bf16.msra.mxu0 0
        %644 = vmatprep.subr.bf16.mxu0 0
        %645 = vmatpush1.bf16.msra.mxu0 0
        %646 = vmatprep.subr.bf16.mxu0 0
        %647 = vmatpush1.bf16.msra.mxu0 0
        %648 = vmatprep.subr.bf16.mxu0 0
        %649 = vmatpush1.bf16.msra.mxu0 0
        %650 = vmatprep.subr.bf16.mxu0 0
        %651 = vmatpush1.bf16.msra.mxu0 0
        %652 = vmatprep.subr.bf16.mxu0 0
        %653 = vmatpush1.bf16.msra.mxu0 0
        %654 = vmatprep.mubr.bf16.mxu0 0
        %655 = vmatmul.mubr.bf16.gmra.mrb[0].mxu0 %v610
        %v656 = vpop.f32.mrb[0].mxu0
        %v657 = vadd.f32 0.0, %v656
        %v658 = vpop.f32.mrb[0].mxu0
        %v659 = vadd.f32 0.0, %v658
        %v660 = vpop.f32.mrb[0].mxu0
        %v661 = vpop.f32.mrb[0].mxu0
        %662 = vdwg.mxu0
        %663 = vmatprep.subr.bf16.mxu0 0
        %664 = vmatpush1.bf16.msra.mxu0 %v583
        %665 = vmatprep.subr.bf16.mxu0 0
        %666 = vmatpush1.bf16.msra.mxu0 %v586
        %667 = vmatprep.subr.bf16.mxu0 0
        %668 = vmatpush1.bf16.msra.mxu0 %v589
        %669 = vmatprep.subr.bf16.mxu0 0
        %670 = vmatpush1.bf16.msra.mxu0 %v592
        %671 = vmatprep.subr.bf16.mxu0 0
        %672 = vmatpush1.bf16.msra.mxu0 %v620
        %673 = vmatprep.subr.bf16.mxu0 0
        %674 = vmatpush1.bf16.msra.mxu0 0
        %675 = vmatprep.subr.bf16.mxu0 0
        %676 = vmatpush1.bf16.msra.mxu0 0
        %677 = vmatprep.subr.bf16.mxu0 0
        %678 = vmatpush1.bf16.msra.mxu0 0
        %679 = vmatprep.subr.bf16.mxu0 0
        %680 = vmatpush1.bf16.msra.mxu0 0
        %681 = vmatprep.subr.bf16.mxu0 0
        %682 = vmatpush1.bf16.msra.mxu0 0
        %683 = vmatprep.subr.bf16.mxu0 0
        %684 = vmatpush1.bf16.msra.mxu0 0
        %685 = vmatprep.subr.bf16.mxu0 0
        %686 = vmatpush1.bf16.msra.mxu0 0
        %687 = vmatprep.subr.bf16.mxu0 0
        %688 = vmatpush1.bf16.msra.mxu0 0
        %689 = vmatprep.subr.bf16.mxu0 0
        %690 = vmatpush1.bf16.msra.mxu0 0
        %691 = vmatprep.subr.bf16.mxu0 0
        %692 = vmatpush1.bf16.msra.mxu0 0
        %693 = vmatprep.subr.bf16.mxu0 0
        %694 = vmatpush1.bf16.msra.mxu0 0
        %695 = vmatprep.mubr.bf16.mxu0 0
        %696 = vmatmul.mubr.bf16.gmra.mrb[0].mxu0 %v610
        %v697 = vpop.f32.mrb[0].mxu0
        %v698 = vadd.f32 0.0, %v697
        %v699 = vpop.f32.mrb[0].mxu0
        %v700 = vpop.f32.mrb[0].mxu0
        %v701 = vpop.f32.mrb[0].mxu0
        %702 = vdwg.mxu0
        %v703 = vld [vmem:[%s2] sm:$0xff]
        %v704 = vld [vmem:[%s2 + $0x8] sm:$0xff]
        %v705 = vld [vmem:[%s2 + $0x10] sm:$0xff]
        %v706 = vld [vmem:[%s2 + $0x18] sm:$0xff]
        %v707 = vld [vmem:[%s2 + $0x20] sm:$0xff]
        %v708 = vld [vmem:[%s2 + $0x28] sm:$0xff]
        %v709 = vld [vmem:[%s2 + $0x30] sm:$0xff]
        %v710 = vld [vmem:[%s2 + $0x38] sm:$0xff]
        %v711 = vld [vmem:[%s2 + $0x40] sm:$0xff]
        %v712 = vld [vmem:[%s2 + $0x48] sm:$0xff]
        %v713 = vld [vmem:[%s2 + $0x50] sm:$0xff]
        %v714 = vld [vmem:[%s2 + $0x58] sm:$0xff]
        %v715 = vld [vmem:[%s2 + $0x60] sm:$0xff]
        %v716 = vld [vmem:[%s2 + $0x68] sm:$0xff]
        %v717 = vld [vmem:[%s2 + $0x70] sm:$0xff]
        %v718 = vld [vmem:[%s2 + $0x78] sm:$0xff]
        %v719 = vld [vmem:[%s2 + $0x80] sm:$0xff]
        %v720 = vld [vmem:[%s2 + $0x88] sm:$0xff]
        %v721 = vld [vmem:[%s2 + $0x90] sm:$0xff]
        %v722 = vld [vmem:[%s2 + $0x98] sm:$0xff]
        %v723 = vld [vmem:[%s2 + $0xa0] sm:$0xff]
        %v724 = vld [vmem:[%s2 + $0xa8] sm:$0xff]
        %v725 = vld [vmem:[%s2 + $0xb0] sm:$0xff]
        %v726 = vld [vmem:[%s2 + $0xb8] sm:$0xff]
        %v727 = vld [vmem:[%s2 + $0xc0] sm:$0xff]
        %v728 = vld [vmem:[%s2 + $0xc8] sm:$0xff]
        %v729 = vld [vmem:[%s2 + $0xd0] sm:$0xff]
        %v730 = vld [vmem:[%s2 + $0xd8] sm:$0xff]
        %v731 = vld [vmem:[%s2 + $0xe0] sm:$0xff]
        %v732 = vld [vmem:[%s2 + $0xe8] sm:$0xff]
        %v733 = vld [vmem:[%s2 + $0xf0] sm:$0xff]
        %v734 = vld [vmem:[%s2 + $0xf8] sm:$0xff]
        %v735 = vld [vmem:[%s2 + $0x100] sm:$0xff]
        %v736 = vld [vmem:[%s2 + $0x108] sm:$0xff]
        %v737 = vld [vmem:[%s2 + $0x110] sm:$0xff]
        %v738 = vld [vmem:[%s2 + $0x118] sm:$0xff]
        %vm739 = vcmask 261120
        %v741 = vsel %vm739, %v698, 0
        %743 = vmatprep.subr.mxu0 0.0
        %744 = vmatpush1.msra.mxu0 %v703
        %745 = vmatprep.subr.mxu0 0.0
        %746 = vmatpush1.msra.mxu0 %v704
        %747 = vmatprep.subr.mxu0 0.0
        %748 = vmatpush1.msra.mxu0 %v705
        %749 = vmatprep.subr.mxu0 0.0
        %750 = vmatpush1.msra.mxu0 %v706
        %751 = vmatprep.subr.mxu0 0.0
        %752 = vmatpush1.msra.mxu0 %v707
        %753 = vmatprep.subr.mxu0 0.0
        %754 = vmatpush1.msra.mxu0 %v708
        %755 = vmatprep.subr.mxu0 0.0
        %756 = vmatpush1.msra.mxu0 %v709
        %757 = vmatprep.subr.mxu0 0.0
        %758 = vmatpush1.msra.mxu0 %v710
        %759 = vmatprep.subr.mxu0 0.0
        %760 = vmatpush1.msra.mxu0 %v711
        %761 = vmatprep.subr.mxu0 0.0
        %762 = vmatpush1.msra.mxu0 %v712
        %763 = vmatprep.subr.mxu0 0.0
        %764 = vmatpush1.msra.mxu0 %v713
        %765 = vmatprep.subr.mxu0 0.0
        %766 = vmatpush1.msra.mxu0 %v714
        %767 = vmatprep.subr.mxu0 0.0
        %768 = vmatpush1.msra.mxu0 %v715
        %769 = vmatprep.subr.mxu0 0.0
        %770 = vmatpush1.msra.mxu0 %v716
        %771 = vmatprep.subr.mxu0 0.0
        %772 = vmatpush1.msra.mxu0 %v717
        %773 = vmatprep.subr.mxu0 0.0
        %774 = vmatpush1.msra.mxu0 %v718
        %775 = vmatprep.subr.mxu0 0.0
        %776 = vmatpush1.msra.mxu0 %v719
        %777 = vmatprep.subr.mxu0 0.0
        %778 = vmatpush1.msra.mxu0 %v720
        %779 = vmatprep.subr.mxu0 0.0
        %780 = vmatpush1.msra.mxu0 %v721
        %781 = vmatprep.subr.mxu0 0.0
        %782 = vmatpush1.msra.mxu0 %v722
        %783 = vmatprep.subr.mxu0 0.0
        %784 = vmatpush1.msra.mxu0 %v723
        %785 = vmatprep.subr.mxu0 0.0
        %786 = vmatpush1.msra.mxu0 %v724
        %787 = vmatprep.subr.mxu0 0.0
        %788 = vmatpush1.msra.mxu0 %v725
        %789 = vmatprep.subr.mxu0 0.0
        %790 = vmatpush1.msra.mxu0 %v726
        %791 = vmatprep.subr.mxu0 0.0
        %792 = vmatpush1.msra.mxu0 %v727
        %793 = vmatprep.subr.mxu0 0.0
        %794 = vmatpush1.msra.mxu0 %v728
        %795 = vmatprep.subr.mxu0 0.0
        %796 = vmatpush1.msra.mxu0 %v729
        %797 = vmatprep.subr.mxu0 0.0
        %798 = vmatpush1.msra.mxu0 %v730
        %799 = vmatprep.subr.mxu0 0.0
        %800 = vmatpush1.msra.mxu0 %v731
        %801 = vmatprep.subr.mxu0 0.0
        %802 = vmatpush1.msra.mxu0 %v732
        %803 = vmatprep.subr.mxu0 0.0
        %804 = vmatpush1.msra.mxu0 %v733
        %805 = vmatprep.subr.mxu0 0.0
        %806 = vmatpush1.msra.mxu0 %v734
        %807 = vmatprep.mubr.f32.mxu0 %v659
        %808 = vmatmul.mubr.f32.gmra.mrb[0].mxu0 %v657
        %v809 = vpop.f32.mrb[0].mxu0
        %v810 = vadd.f32 0.0, %v809
        %v811 = vpop.f32.mrb[0].mxu0
        %812 = vdwg.mxu0
        %813 = vmatprep.subr.mxu0 0.0
        %814 = vmatpush1.msra.mxu0 %v735
        %815 = vmatprep.subr.mxu0 0.0
        %816 = vmatpush1.msra.mxu0 %v736
        %817 = vmatprep.subr.mxu0 0.0
        %818 = vmatpush1.msra.mxu0 %v737
        %819 = vmatprep.subr.mxu0 0.0
        %820 = vmatpush1.msra.mxu0 %v738
        %821 = vmatprep.subr.mxu0 0.0
        %822 = vmatpush1.msra.mxu0 0.0
        %823 = vmatprep.subr.mxu0 0.0
        %824 = vmatpush1.msra.mxu0 0.0
        %825 = vmatprep.subr.mxu0 0.0
        %826 = vmatpush1.msra.mxu0 0.0
        %827 = vmatprep.subr.mxu0 0.0
        %828 = vmatpush1.msra.mxu0 0.0
        %829 = vmatprep.subr.mxu0 0.0
        %830 = vmatpush1.msra.mxu0 0.0
        %831 = vmatprep.subr.mxu0 0.0
        %832 = vmatpush1.msra.mxu0 0.0
        %833 = vmatprep.subr.mxu0 0.0
        %834 = vmatpush1.msra.mxu0 0.0
        %835 = vmatprep.subr.mxu0 0.0
        %836 = vmatpush1.msra.mxu0 0.0
        %837 = vmatprep.subr.mxu0 0.0
        %838 = vmatpush1.msra.mxu0 0.0
        %839 = vmatprep.subr.mxu0 0.0
        %840 = vmatpush1.msra.mxu0 0.0
        %841 = vmatprep.subr.mxu0 0.0
        %842 = vmatpush1.msra.mxu0 0.0
        %843 = vmatprep.subr.mxu0 0.0
        %844 = vmatpush1.msra.mxu0 0.0
        %845 = vmatprep.subr.mxu0 0.0
        %846 = vmatpush1.msra.mxu0 0.0
        %847 = vmatprep.subr.mxu0 0.0
        %848 = vmatpush1.msra.mxu0 0.0
        %849 = vmatprep.subr.mxu0 0.0
        %850 = vmatpush1.msra.mxu0 0.0
        %851 = vmatprep.subr.mxu0 0.0
        %852 = vmatpush1.msra.mxu0 0.0
        %853 = vmatprep.subr.mxu0 0.0
        %854 = vmatpush1.msra.mxu0 0.0
        %855 = vmatprep.subr.mxu0 0.0
        %856 = vmatpush1.msra.mxu0 0.0
        %857 = vmatprep.subr.mxu0 0.0
        %858 = vmatpush1.msra.mxu0 0.0
        %859 = vmatprep.subr.mxu0 0.0
        %860 = vmatpush1.msra.mxu0 0.0
        %861 = vmatprep.subr.mxu0 0.0
        %862 = vmatpush1.msra.mxu0 0.0
        %863 = vmatprep.subr.mxu0 0.0
        %864 = vmatpush1.msra.mxu0 0.0
        %865 = vmatprep.subr.mxu0 0.0
        %866 = vmatpush1.msra.mxu0 0.0
        %867 = vmatprep.subr.mxu0 0.0
        %868 = vmatpush1.msra.mxu0 0.0
        %869 = vmatprep.subr.mxu0 0.0
        %870 = vmatpush1.msra.mxu0 0.0
        %871 = vmatprep.subr.mxu0 0.0
        %872 = vmatpush1.msra.mxu0 0.0
        %873 = vmatprep.subr.mxu0 0.0
        %874 = vmatpush1.msra.mxu0 0.0
        %875 = vmatprep.subr.mxu0 0.0
        %876 = vmatpush1.msra.mxu0 0.0
        %877 = vmatprep.mubr.f32.mxu0 0.0
        %878 = vmatmul.mubr.f32.gmra.mrb[0].mxu0 %v741
        %v879 = vpop.f32.mrb[0].mxu0
        %v880 = vadd.f32 %v810, %v879
        %v881 = vpop.f32.mrb[0].mxu0
        %882 = vdwg.mxu0
        %vm883 = vcmask 1024
        %v884 = vsel %vm883, %v880, 0.0
        %885 = vadd.xlane.f32.xlu0 %v884
        %v886 = vpop.xlane.xlu0 %885
        %v887 = vrot.slane %v886, 4
        %v888 = vadd.f32 %v886, %v887
        %v889 = vrot.slane %v888, 2
        %v890 = vadd.f32 %v888, %v889
        %v891 = vrot.slane %v890, 1
        %v892 = vadd.f32 %v890, %v891
        %s893 = vtos %v892
        %v894 = vstv %s893
        %v895 = vmul.f32 %v894, 0.001953125
        %v896 = vsub.f32 %v657, %v895
        %v897 = vsub.f32 %v659, %v895
        %v898 = vsub.f32 %v698, %v895
        %v899 = vmul.f32 %v896, %v896
        %v900 = vmul.f32 %v897, %v897
        %v901 = vmul.f32 %v898, %v898
        %v903 = vsel %vm739, %v901, 0
        %905 = vmatprep.subr.mxu0 0.0
        %906 = vmatpush1.msra.mxu0 %v703
        %907 = vmatprep.subr.mxu0 0.0
        %908 = vmatpush1.msra.mxu0 %v704
        %909 = vmatprep.subr.mxu0 0.0
        %910 = vmatpush1.msra.mxu0 %v705
        %911 = vmatprep.subr.mxu0 0.0
        %912 = vmatpush1.msra.mxu0 %v706
        %913 = vmatprep.subr.mxu0 0.0
        %914 = vmatpush1.msra.mxu0 %v707
        %915 = vmatprep.subr.mxu0 0.0
        %916 = vmatpush1.msra.mxu0 %v708
        %917 = vmatprep.subr.mxu0 0.0
        %918 = vmatpush1.msra.mxu0 %v709
        %919 = vmatprep.subr.mxu0 0.0
        %920 = vmatpush1.msra.mxu0 %v710
        %921 = vmatprep.subr.mxu0 0.0
        %922 = vmatpush1.msra.mxu0 %v711
        %923 = vmatprep.subr.mxu0 0.0
        %924 = vmatpush1.msra.mxu0 %v712
        %925 = vmatprep.subr.mxu0 0.0
        %926 = vmatpush1.msra.mxu0 %v713
        %927 = vmatprep.subr.mxu0 0.0
        %928 = vmatpush1.msra.mxu0 %v714
        %929 = vmatprep.subr.mxu0 0.0
        %930 = vmatpush1.msra.mxu0 %v715
        %931 = vmatprep.subr.mxu0 0.0
        %932 = vmatpush1.msra.mxu0 %v716
        %933 = vmatprep.subr.mxu0 0.0
        %934 = vmatpush1.msra.mxu0 %v717
        %935 = vmatprep.subr.mxu0 0.0
        %936 = vmatpush1.msra.mxu0 %v718
        %937 = vmatprep.subr.mxu0 0.0
        %938 = vmatpush1.msra.mxu0 %v719
        %939 = vmatprep.subr.mxu0 0.0
        %940 = vmatpush1.msra.mxu0 %v720
        %941 = vmatprep.subr.mxu0 0.0
        %942 = vmatpush1.msra.mxu0 %v721
        %943 = vmatprep.subr.mxu0 0.0
        %944 = vmatpush1.msra.mxu0 %v722
        %945 = vmatprep.subr.mxu0 0.0
        %946 = vmatpush1.msra.mxu0 %v723
        %947 = vmatprep.subr.mxu0 0.0
        %948 = vmatpush1.msra.mxu0 %v724
        %949 = vmatprep.subr.mxu0 0.0
        %950 = vmatpush1.msra.mxu0 %v725
        %951 = vmatprep.subr.mxu0 0.0
        %952 = vmatpush1.msra.mxu0 %v726
        %953 = vmatprep.subr.mxu0 0.0
        %954 = vmatpush1.msra.mxu0 %v727
        %955 = vmatprep.subr.mxu0 0.0
        %956 = vmatpush1.msra.mxu0 %v728
        %957 = vmatprep.subr.mxu0 0.0
        %958 = vmatpush1.msra.mxu0 %v729
        %959 = vmatprep.subr.mxu0 0.0
        %960 = vmatpush1.msra.mxu0 %v730
        %961 = vmatprep.subr.mxu0 0.0
        %962 = vmatpush1.msra.mxu0 %v731
        %963 = vmatprep.subr.mxu0 0.0
        %964 = vmatpush1.msra.mxu0 %v732
        %965 = vmatprep.subr.mxu0 0.0
        %966 = vmatpush1.msra.mxu0 %v733
        %967 = vmatprep.subr.mxu0 0.0
        %968 = vmatpush1.msra.mxu0 %v734
        %969 = vmatprep.mubr.f32.mxu0 %v900
        %970 = vmatmul.mubr.f32.gmra.mrb[0].mxu0 %v899
        %v971 = vpop.f32.mrb[0].mxu0
        %v972 = vadd.f32 0.0, %v971
        %v973 = vpop.f32.mrb[0].mxu0
        %974 = vdwg.mxu0
        %975 = vmatprep.subr.mxu0 0.0
        %976 = vmatpush1.msra.mxu0 %v735
        %977 = vmatprep.subr.mxu0 0.0
        %978 = vmatpush1.msra.mxu0 %v736
        %979 = vmatprep.subr.mxu0 0.0
        %980 = vmatpush1.msra.mxu0 %v737
        %981 = vmatprep.subr.mxu0 0.0
        %982 = vmatpush1.msra.mxu0 %v738
        %983 = vmatprep.subr.mxu0 0.0
        %984 = vmatpush1.msra.mxu0 0.0
        %985 = vmatprep.subr.mxu0 0.0
        %986 = vmatpush1.msra.mxu0 0.0
        %987 = vmatprep.subr.mxu0 0.0
        %988 = vmatpush1.msra.mxu0 0.0
        %989 = vmatprep.subr.mxu0 0.0
        %990 = vmatpush1.msra.mxu0 0.0
        %991 = vmatprep.subr.mxu0 0.0
        %992 = vmatpush1.msra.mxu0 0.0
        %993 = vmatprep.subr.mxu0 0.0
        %994 = vmatpush1.msra.mxu0 0.0
        %995 = vmatprep.subr.mxu0 0.0
        %996 = vmatpush1.msra.mxu0 0.0
        %997 = vmatprep.subr.mxu0 0.0
        %998 = vmatpush1.msra.mxu0 0.0
        %999 = vmatprep.subr.mxu0 0.0
        %1000 = vmatpush1.msra.mxu0 0.0
        %1001 = vmatprep.subr.mxu0 0.0
        %1002 = vmatpush1.msra.mxu0 0.0
        %1003 = vmatprep.subr.mxu0 0.0
        %1004 = vmatpush1.msra.mxu0 0.0
        %1005 = vmatprep.subr.mxu0 0.0
        %1006 = vmatpush1.msra.mxu0 0.0
        %1007 = vmatprep.subr.mxu0 0.0
        %1008 = vmatpush1.msra.mxu0 0.0
        %1009 = vmatprep.subr.mxu0 0.0
        %1010 = vmatpush1.msra.mxu0 0.0
        %1011 = vmatprep.subr.mxu0 0.0
        %1012 = vmatpush1.msra.mxu0 0.0
        %1013 = vmatprep.subr.mxu0 0.0
        %1014 = vmatpush1.msra.mxu0 0.0
        %1015 = vmatprep.subr.mxu0 0.0
        %1016 = vmatpush1.msra.mxu0 0.0
        %1017 = vmatprep.subr.mxu0 0.0
        %1018 = vmatpush1.msra.mxu0 0.0
        %1019 = vmatprep.subr.mxu0 0.0
        %1020 = vmatpush1.msra.mxu0 0.0
        %1021 = vmatprep.subr.mxu0 0.0
        %1022 = vmatpush1.msra.mxu0 0.0
        %1023 = vmatprep.subr.mxu0 0.0
        %1024 = vmatpush1.msra.mxu0 0.0
        %1025 = vmatprep.subr.mxu0 0.0
        %1026 = vmatpush1.msra.mxu0 0.0
        %1027 = vmatprep.subr.mxu0 0.0
        %1028 = vmatpush1.msra.mxu0 0.0
        %1029 = vmatprep.subr.mxu0 0.0
        %1030 = vmatpush1.msra.mxu0 0.0
        %1031 = vmatprep.subr.mxu0 0.0
        %1032 = vmatpush1.msra.mxu0 0.0
        %1033 = vmatprep.subr.mxu0 0.0
        %1034 = vmatpush1.msra.mxu0 0.0
        %1035 = vmatprep.subr.mxu0 0.0
        %1036 = vmatpush1.msra.mxu0 0.0
        %1037 = vmatprep.subr.mxu0 0.0
        %1038 = vmatpush1.msra.mxu0 0.0
        %1039 = vmatprep.mubr.f32.mxu0 0.0
        %1040 = vmatmul.mubr.f32.gmra.mrb[0].mxu0 %v903
        %v1041 = vpop.f32.mrb[0].mxu0
        %v1042 = vadd.f32 %v972, %v1041
        %v1043 = vpop.f32.mrb[0].mxu0
        %1044 = vdwg.mxu0
        %v1045 = vsel %vm883, %v1042, 0.0
        %1046 = vadd.xlane.f32.xlu0 %v1045
        %v1047 = vpop.xlane.xlu0 %1046
        %v1048 = vrot.slane %v1047, 4
        %v1049 = vadd.f32 %v1047, %v1048
        %v1050 = vrot.slane %v1049, 2
        %v1051 = vadd.f32 %v1049, %v1050
        %v1052 = vrot.slane %v1051, 1
        %v1053 = vadd.f32 %v1051, %v1052
        %s1054 = vtos %v1053
        %v1055 = vstv %s1054
        %v1056 = vmul.f32 %v1055, 0.001953125
        %v1057 = vadd.f32 %v1056, 1e-05
        %v1058 = vrsqrt.pop %v1057
        %v1059 = vmul.f32 %v896, %v1058
        %v1060 = vmul.f32 %v897, %v1058
        %v1061 = vmul.f32 %v898, %v1058
        %v1062 = vmax.f32 %v1059, 0.0
        %v1063 = vmax.f32 %v1060, 0.0
        %v1064 = vmax.f32 %v1061, 0.0
        %v1068 = vcombine.low %v1062, %v1063
        %v1070 = vunpack.c.l.s4 1983009808
        %v1071 = vunpack.c.0.s8 %v1070
        %v1072 = vlaneseq
        %v1073 = vshrl.u32 %v1072, 7
        %v1074 = vsub.s32 %v1071, %v1073
        %v1075 = vrot.slane %v1068, %v1074
        %v1077 = vunpack.c.l.s4 1983009808
        %v1078 = vunpack.c.0.s8 %v1077
        %v1079 = vlaneseq
        %v1080 = vshrl.u32 %v1079, 7
        %v1081 = vsub.s32 %v1078, %v1080
        %v1082 = vrot.slane %v1064, %v1081
        %v1083 = vcombine.low %v1075, %v1082
        %vm1085 = vcmask 1041408
        %vm1086 = vcmask 1043458
        %vm1087 = vmor %vm1086, %vm1085
        %vm1088 = vcmask 259076
        %vm1089 = vmor %vm1088, %vm1087
        %1090 = vst.msk [vmem:[%s188] sm:$0x3f] %vm1089, %v1083
        %s1091 = sand.u32 %s112, 1
        %s1092 = scalar_lea.sflag [#allocation5], %s1091
        %s1093 = sand.u32 %s112, 1
        %s1094 = smul.addr %s1093, 6
        %s1095 = scalar_lea.vmem [#allocation4], %s1094
        // Predicated region
        $region37: #{tpu_custom_call.1} parent=31 // pred_check
          %p1096 = pneg %p122
        $region38: #{tpu_custom_call.1} parent=31 // pred_check_branch
          %1098 = sbr.rel (%p1096) target = $region40
        $region39: #{tpu_custom_call.1} parent=31 // pred_region
          %s1100 = ssub.s32 96, 96
          %1101 = vsyncadd %s1092, %s1100
          %s1102 = smul.addr %s22, 3
          %s1103 = smul.addr %s21, 12
          %s1104 = sadd.s32 %s1102, %s1103
          %s1105 = smul.addr %s1104, 32
          %s1106 = scalar_lea.hbm %s3, %s1105
          %s1108 = sshll.u32 %s1095, 4
          %s1109 = int_to_ptr.vmem [resolvable:$true] %s1108
          %1111 = dma.vmem_to_hbm [thread:$0]  %s1109, 96, %s1106, %s1092
        $region40: #{tpu_custom_call.1} parent=31 // pred_fallthru
          _
      $region32: #{tpu_custom_call.1} parent=5 // pred_fallthru
        _
      %p1112 = scmp.le.s32.totalorder 2, %s12
      // Predicated region
      $region41: #{tpu_custom_call.1} parent=5 // pred_check
        %p1113 = pneg %p1112
      $region42: #{tpu_custom_call.1} parent=5 // pred_check_branch
        %1115 = sbr.rel (%p1113) target = $region44
      $region43: #{tpu_custom_call.1} parent=5 // pred_region
        %s1116 = ssub.s32 %s12, 2
        // Predicated region
        $region45: #{tpu_custom_call.1} parent=43 // pred_check
          %p1117 = pneg %p128
        $region46: #{tpu_custom_call.1} parent=43 // pred_check_branch
          %1119 = sbr.rel (%p1117) target = $region48
        $region47: #{tpu_custom_call.1} parent=43 // pred_region
          %s1120 = sand.u32 %s113, 1
          %s1121 = scalar_lea.sflag [#allocation5], %s1120
          %s1122 = sand.u32 %s113, 1
          %s1123 = smul.addr %s1122, 6
          %s1124 = scalar_lea.vmem [#allocation4], %s1123
          %1125 = dma.done %s1121, 96
        $region48: #{tpu_custom_call.1} parent=43 // pred_fallthru
          _
      $region44: #{tpu_custom_call.1} parent=5 // pred_fallthru
        _
    $region6: #{tpu_custom_call.1} parent=1 // loop_footer
      %s16 = sadd.s32 1, %s12
    $region7: #{tpu_custom_call.1} parent=1 // loop_footer_branch
      %11 = sbr.rel target = $region3
    $region8: #{tpu_custom_call.1} parent=1 // loop_exit
      _
    %1126 = vsyncpa [#allocation5], 1
    %s1127 = scalar_lea.sflag [#allocation5], 1
    %1128 = vsyncpa %s1127, 1

</llo_original>
